<compile_context>
chip_gen: v6e
topology: v6e:2x2x1
jax: 0.10.0
libtpu: 0.0.40
codegen_flags: <defaults>
</compile_context>

<pallas_src>
import numpy as np
import jax
import jax.numpy as jnp
from jax.experimental import pallas as pl
from jax.experimental.pallas import tpu as pltpu


# -----------------------------------------------------------------------------
# Hexagonal geometry: 7 taps of a kernel_size=1 hex kernel, weight-slot order:
#   0: centre  1: north (r-1,c)  2: south (r+1,c)  3: UL  4: LL  5: UR  6: LR
# (odd columns shifted down by half a cell)
# -----------------------------------------------------------------------------
def _hex_neighbors(r, c):
    if c % 2 == 0:
        side = [(r - 1, c - 1), (r, c - 1), (r - 1, c + 1), (r, c + 1)]
    else:
        side = [(r, c - 1), (r + 1, c - 1), (r, c + 1), (r + 1, c + 1)]
    return [(r, c), (r - 1, c), (r + 1, c)] + side


def _build_fused_operator(w_hex, b_conv, wo, h, w, stride=2):
    """Bake hex-conv(k=1) + the gather of the 7 hex-pool taps of every stride-2
    pool centre into a dense operator (pure weight preprocessing).

    Returns:
      a   : (7*blk, h*w + 1) f32 -- row q = k*blk + (f*Hp*Wp + R*Wp + C) holds the
            conv weights for pool-tap k of centre (R,C), filter f; the last column
            holds the conv bias (multiplied by the in-grid mask of the tap).
      wo2 : (blk, 1) f32 -- final Linear weights, padded rows zeroed.
    """
    f = w_hex.shape[0]
    hp = (h - 1) // stride + 1
    wp = (w - 1) // stride + 1
    p = h * w
    npool = f * hp * wp
    blk = -(-npool // 8) * 8              # sublane-align the tap block (196 -> 200)
    n_slots = 7

    t0 = np.zeros((n_slots, hp * wp, 7, p), np.float32)   # conv-tap routing (constant)
    c0 = np.zeros((n_slots, hp * wp), np.float32)         # bias routing / in-grid mask
    for k in range(n_slots):
        for rr in range(hp):
            for cc in range(wp):
                rc = rr * wp + cc
                r0, col0 = _hex_neighbors(stride * rr, stride * cc)[k]
                if not (0 <= r0 < h and 0 <= col0 < w):
                    continue               # out-of-grid pool tap -> contributes 0 (post-ReLU pad)
                c0[k, rc] = 1.0
                for s, (r1, col1) in enumerate(_hex_neighbors(r0, col0)):
                    if 0 <= r1 < h and 0 <= col1 < w:
                        t0[k, rc, s, r1 * w + col1] = 1.0

    t0 = jnp.asarray(t0)
    c0 = jnp.asarray(c0)
    m = jnp.einsum('krsp,fs->kfrp', t0, w_hex,
                   precision=jax.lax.Precision.HIGHEST).reshape(n_slots, npool, p)
    b = jnp.einsum('kr,f->kfr', c0, b_conv).reshape(n_slots, npool, 1)
    a = jnp.concatenate([m, b], axis=-1)                    # bias rides in column p
    a = jnp.pad(a, ((0, 0), (0, blk - npool), (0, 0))).reshape(n_slots * blk, p + 1)
    wo2 = jnp.pad(wo.reshape(npool), (0, blk - npool)).reshape(blk, 1)
    return a, wo2, n_slots, blk


def _make_kernel(n_slots, blk):
    def kernel(xT_ref, a_ref, wo2_ref, bo_ref, out_ref):
        xT = xT_ref[...]                                          # (K, TILE_N) bf16, samples on lanes
        # One MXU matmul: conv value (+bias via the ones row of xT) at every
        # (pool-tap k, filter f, pool centre R,C).  f32 accumulation.
        y = jnp.dot(a_ref[...], xT, preferred_element_type=jnp.float32)
        y = jnp.maximum(y, 0.0)                                   # ReLU (all taps at once)
        # Hexagonal max-pool = running max over the 7 aligned 200-row tap blocks.
        pooled = y[0:blk, :]
        for k in range(1, n_slots):
            pooled = jnp.maximum(pooled, y[k * blk:(k + 1) * blk, :])
        # Linear(196 -> 1): VPU multiply + sublane reduce -> lane-dense (1, TILE_N).
        out_ref[...] = (jnp.sum(pooled * wo2_ref[...], axis=0, keepdims=True)
                        + bo_ref[0, 0])
    return kernel


def _choose_tile_n(n, requested):
    """Lane-dense tile (multiple of 128); prefer >=2 grid steps once the batch
    allows it so v7x's two TensorCores both get work."""
    n128 = -(-n // 128) * 128
    t = max(128, (min(requested, n128) // 128) * 128)
    if n128 >= 256:
        t = min(t, max(128, (n128 // 2) // 128 * 128))
    return t


def sam_fixed_convnet_forward(x, w_hex, b_conv, wo, bo, *, tile_n=512):
    """x: (N, 1, H, W) f32; w_hex: (F, 7); b_conv: (F,); wo: (F*Hp*Wp,); bo: (1,).
    Returns (N, 1) f32."""
    n, c_in, h, w = x.shape
    assert c_in == 1
    p = h * w
    a, wo2, n_slots, blk = _build_fused_operator(w_hex, b_conv, wo, h, w)
    rows = n_slots * blk
    k_dim = p + 1                                   # +1: ones row carries the conv bias

    t = _choose_tile_n(n, tile_n)
    n_pad = -(-n // t) * t

    x_flat = x.reshape(n, p).astype(jnp.float32)
    if n_pad != n:
        x_flat = jnp.pad(x_flat, ((0, n_pad - n), (0, 0)))
    xT = jnp.concatenate([x_flat.T, jnp.ones((1, n_pad), jnp.float32)], axis=0)
    xT = xT.astype(jnp.bfloat16)                    # (K, N_pad): samples on the lane axis
    a_bf16 = a.astype(jnp.bfloat16)                 # bf16 MXU operand, f32 accumulation
    wo2 = wo2.astype(jnp.float32)
    bo2d = jnp.reshape(bo, (1, 1)).astype(jnp.float32)

    cost = pl.CostEstimate(
        flops=int(2 * rows * k_dim * n_pad + (n_slots + 2) * blk * n_pad),
        transcendentals=0,
        bytes_accessed=int(2 * (k_dim * n_pad + rows * k_dim) + 4 * (blk + n_pad + 1)),
    )
    out = pl.pallas_call(
        _make_kernel(n_slots, blk),
        out_shape=jax.ShapeDtypeStruct((1, n_pad), jnp.float32),
        grid=(n_pad // t,),
        in_specs=[
            pl.BlockSpec((k_dim, t), lambda i: (0, i)),         # x tile (streamed / pipelined), bf16
            pl.BlockSpec((rows, k_dim), lambda i: (0, 0)),      # fused conv+pool operator (resident), bf16
            pl.BlockSpec((blk, 1), lambda i: (0, 0)),           # final linear weights (resident), f32
            pl.BlockSpec(memory_space=pltpu.MemorySpace.SMEM),  # final linear bias (scalar)
        ],
        out_specs=pl.BlockSpec((1, t), lambda i: (0, i)),       # lane-dense output row
        compiler_params=pltpu.CompilerParams(
            dimension_semantics=("parallel",)),                 # shard batch grid over TCs
        cost_estimate=cost,
    )(xT, a_bf16, wo2, bo2d)
    return out[0, :n].reshape(n, 1)


def sam_fixed_convnet_reference(x, w_hex, b_conv, wo, bo):
    """Pure-JAX structural reference (explicit hex conv / ReLU / hex max-pool /
    flatten / linear); does NOT use the fused operator."""
    n, _, h, w = x.shape
    col_even = (jnp.arange(w) % 2 == 0)

    def hex_stack(a):  # (..., H, W) -> (..., 7, H, W) zero-padded hex-neighbour maps
        pad = [(0, 0)] * (a.ndim - 2) + [(1, 1), (1, 1)]
        ap = jnp.pad(a, pad)
        cen = ap[..., 1:h + 1, 1:w + 1]
        nn_ = ap[..., 0:h, 1:w + 1]
        ss_ = ap[..., 2:h + 2, 1:w + 1]
        ww_ = ap[..., 1:h + 1, 0:w]
        ee_ = ap[..., 1:h + 1, 2:w + 2]
        nw_ = ap[..., 0:h, 0:w]
        ne_ = ap[..., 0:h, 2:w + 2]
        sw_ = ap[..., 2:h + 2, 0:w]
        se_ = ap[..., 2:h + 2, 2:w + 2]
        ev = col_even.reshape((1,) * (a.ndim - 1) + (w,))
        ul = jnp.where(ev, nw_, ww_)
        ll = jnp.where(ev, ww_, sw_)
        ur = jnp.where(ev, ne_, ee_)
        lr = jnp.where(ev, ee_, se_)
        return jnp.stack([cen, nn_, ss_, ul, ll, ur, lr], axis=-3)

    conv = (jnp.einsum('nkhw,fk->nfhw', hex_stack(x[:, 0]), w_hex,
                       precision=jax.lax.Precision.HIGHEST)
            + b_conv[None, :, None, None])
    act = jnp.maximum(conv, 0.0)
    pool_full = jnp.max(hex_stack(act), axis=-3)   # hex max over the k=1 neighbourhood
    pooled = pool_full[:, :, ::2, ::2]             # stride-2 hex subsample
    flat = pooled.reshape(n, -1)
    # Elementwise multiply + sum (precision-unambiguous final linear).
    return jnp.sum(flat * wo.reshape(1, -1), axis=1, keepdims=True) + bo.reshape(1, 1)


if __name__ == "__main__":
    # Module defaults: n_conv_filters=4, ny=nz=13 -> pool output 7x7, n_pool_out=196, n_out=1.
    n_filters = 4
    h = w = 13
    hp = (h - 1) // 2 + 1
    wp = (w - 1) // 2 + 1
    n_pool_out = n_filters * hp * wp            # 196
    batch = 8

    key = jax.random.PRNGKey(0)
    k_x, k_w, k_b, k_wo, k_bo = jax.random.split(key, 5)

    x = jax.random.normal(k_x, (batch, 1, h, w), dtype=jnp.float32)

    bnd1 = 1.0 / np.sqrt(7.0)                   # 7 hex taps, 1 input channel
    w_hex = jax.random.uniform(k_w, (n_filters, 7), minval=-bnd1, maxval=bnd1,
                               dtype=jnp.float32)
    b_conv = jax.random.uniform(k_b, (n_filters,), minval=-bnd1, maxval=bnd1,
                                dtype=jnp.float32)
    bnd2 = 1.0 / np.sqrt(float(n_pool_out))
    wo = jax.random.uniform(k_wo, (n_pool_out,), minval=-bnd2, maxval=bnd2,
                            dtype=jnp.float32)
    bo = jax.random.uniform(k_bo, (1,), minval=-bnd2, maxval=bnd2,
                            dtype=jnp.float32)

    out = sam_fixed_convnet_forward(x, w_hex, b_conv, wo, bo, tile_n=512)
    out = jax.block_until_ready(out)
    assert out.shape == (batch, 1), out.shape

    # Tight structural check: feed the reference the same bf16-rounded x / conv
    # weights the kernel uses (the only quantisation it introduces); remaining
    # differences are f32 accumulation-order noise.
    q = lambda v: v.astype(jnp.bfloat16).astype(jnp.float32)
    ref_q = sam_fixed_convnet_reference(q(x), q(w_hex), q(b_conv), wo, bo)
    assert jnp.allclose(out, ref_q, atol=2e-4, rtol=2e-4), \
        float(jnp.max(jnp.abs(out - ref_q)))

    # Loose check against the pure-f32 reference (bounds the bf16 quantisation error).
    ref_f = sam_fixed_convnet_reference(x, w_hex, b_conv, wo, bo)
    assert jnp.allclose(out, ref_f, atol=3e-2, rtol=3e-2), \
        float(jnp.max(jnp.abs(out - ref_f)))

    print("KERNEL_OK")
</pallas_src>

<mosaic_0001>
module attributes {stable_mosaic.version = 11 : i64} {
  func.func @kernel(%arg0: i32, %arg1: memref<170x128xbf16, #tpu.memory_space<vmem>>, %arg2: memref<1400x170xbf16, #tpu.memory_space<vmem>>, %arg3: memref<200x1xf32, #tpu.memory_space<vmem>>, %arg4: memref<1x1xf32, #tpu.memory_space<smem>>, %arg5: memref<1x128xf32, #tpu.memory_space<vmem>>) attributes {dimension_semantics = [#tpu.dimension_semantics<parallel>], iteration_bounds = array<i64: 1>, scalar_prefetch = 0 : i64, scratch_operands = 0 : i64, tpu.core_type = #tpu.core_type<tc>, window_params = [{transform_indices = @transform_0, window_bounds = array<i64: 170, 128>}, {pipeline_mode = #tpu.pipeline_mode<synchronous>, transform_indices = @transform_1, window_bounds = array<i64: 1400, 170>}, {pipeline_mode = #tpu.pipeline_mode<synchronous>, transform_indices = @transform_2, window_bounds = array<i64: 200, 1>}, {transform_indices = @transform_3, window_bounds = array<i64: 1, 1>}, {transform_indices = @transform_4, window_bounds = array<i64: 1, 128>}]} {
    %c0 = arith.constant 0 : index
    %c0_0 = arith.constant 0 : index
    %0 = vector.load %arg1[%c0, %c0_0] : memref<170x128xbf16, #tpu.memory_space<vmem>>, vector<170x128xbf16>
    %c0_1 = arith.constant 0 : index
    %c0_2 = arith.constant 0 : index
    %1 = vector.load %arg2[%c0_1, %c0_2] : memref<1400x170xbf16, #tpu.memory_space<vmem>>, vector<1400x170xbf16>
    %cst = arith.constant dense<0.000000e+00> : vector<1400x128xf32>
    %2 = tpu.matmul %1, %0, %cst {dimension_numbers = #tpu.dot_dimension_numbers<[1], [0], [0], [1], [0, 0, 1, 1], [], []>} : vector<1400x170xbf16>, vector<170x128xbf16>, vector<1400x128xf32> -> vector<1400x128xf32>
    %cst_3 = arith.constant 0.000000e+00 : f32
    %3 = vector.broadcast %cst_3 : f32 to vector<1400x128xf32>
    %4 = arith.maximumf %2, %3 : vector<1400x128xf32>
    %5 = vector.extract_strided_slice %4 {offsets = [0, 0], sizes = [200, 128], strides = [1, 1]} : vector<1400x128xf32> to vector<200x128xf32>
    %6 = vector.extract_strided_slice %4 {offsets = [200, 0], sizes = [200, 128], strides = [1, 1]} : vector<1400x128xf32> to vector<200x128xf32>
    %7 = arith.maximumf %5, %6 : vector<200x128xf32>
    %8 = vector.extract_strided_slice %4 {offsets = [400, 0], sizes = [200, 128], strides = [1, 1]} : vector<1400x128xf32> to vector<200x128xf32>
    %9 = arith.maximumf %7, %8 : vector<200x128xf32>
    %10 = vector.extract_strided_slice %4 {offsets = [600, 0], sizes = [200, 128], strides = [1, 1]} : vector<1400x128xf32> to vector<200x128xf32>
    %11 = arith.maximumf %9, %10 : vector<200x128xf32>
    %12 = vector.extract_strided_slice %4 {offsets = [800, 0], sizes = [200, 128], strides = [1, 1]} : vector<1400x128xf32> to vector<200x128xf32>
    %13 = arith.maximumf %11, %12 : vector<200x128xf32>
    %14 = vector.extract_strided_slice %4 {offsets = [1000, 0], sizes = [200, 128], strides = [1, 1]} : vector<1400x128xf32> to vector<200x128xf32>
    %15 = arith.maximumf %13, %14 : vector<200x128xf32>
    %16 = vector.extract_strided_slice %4 {offsets = [1200, 0], sizes = [200, 128], strides = [1, 1]} : vector<1400x128xf32> to vector<200x128xf32>
    %17 = arith.maximumf %15, %16 : vector<200x128xf32>
    %c0_4 = arith.constant 0 : index
    %c0_5 = arith.constant 0 : index
    %18 = vector.load %arg3[%c0_4, %c0_5] : memref<200x1xf32, #tpu.memory_space<vmem>>, vector<200x1xf32>
    %19 = vector.broadcast %18 : vector<200x1xf32> to vector<200x128xf32>
    %20 = arith.mulf %17, %19 : vector<200x128xf32>
    %cst_6 = arith.constant dense<0.000000e+00> : vector<128xf32>
    %21 = vector.multi_reduction <add>, %20, %cst_6 [0] : vector<200x128xf32> to vector<128xf32>
    %22 = vector.shape_cast %21 : vector<128xf32> to vector<1x128xf32>
    %c0_7 = arith.constant 0 : index
    %c0_8 = arith.constant 0 : index
    %23 = memref.load %arg4[%c0_7, %c0_8] : memref<1x1xf32, #tpu.memory_space<smem>>
    %24 = vector.broadcast %23 : f32 to vector<1x128xf32>
    %25 = arith.addf %22, %24 : vector<1x128xf32>
    %c0_9 = arith.constant 0 : index
    %c0_10 = arith.constant 0 : index
    %26 = vector.load %arg5[%c0_9, %c0_10] : memref<1x128xf32, #tpu.memory_space<vmem>>, vector<1x128xf32>
    tpu.vector_store %arg5[%c0_9, %c0_10], %25 {strides = array<i32>} : memref<1x128xf32, #tpu.memory_space<vmem>>, vector<1x128xf32>,
    return
  }
  func.func @transform_0(%arg0: i32) -> (i32, i32) {
    %c0_i32 = arith.constant 0 : i32
    %c0_i32_0 = arith.constant 0 : i32
    return %c0_i32, %arg0 : i32, i32
  }
  func.func @transform_1(%arg0: i32) -> (i32, i32) {
    %c0_i32 = arith.constant 0 : i32
    %c0_i32_0 = arith.constant 0 : i32
    %c0_i32_1 = arith.constant 0 : i32
    return %c0_i32, %c0_i32_0 : i32, i32
  }
  func.func @transform_2(%arg0: i32) -> (i32, i32) {
    %c0_i32 = arith.constant 0 : i32
    %c0_i32_0 = arith.constant 0 : i32
    %c0_i32_1 = arith.constant 0 : i32
    return %c0_i32, %c0_i32_0 : i32, i32
  }
  func.func @transform_3(%arg0: i32) -> (i32, i32) {
    %c0_i32 = arith.constant 0 : i32
    %c0_i32_0 = arith.constant 0 : i32
    %c0_i32_1 = arith.constant 0 : i32
    return %c0_i32, %c0_i32_0 : i32, i32
  }
  func.func @transform_4(%arg0: i32) -> (i32, i32) {
    %c0_i32 = arith.constant 0 : i32
    %c0_i32_0 = arith.constant 0 : i32
    return %c0_i32, %arg0 : i32, i32
  }
}

</mosaic_0001>

<llo_original>
// kernel: tpu_custom_call.1
$region0: #{tpu_custom_call.1}
  #allocation0 [shape = 'u32[]', space=smem, size = 0x4, offset = 0x4, fixed_abs, tag = 'smem constant byte address 0x4 - core index']
  #allocation1 [shape = 'u32[144,128]{1,0:T(1,128)}', space=vmem, size = 0x12000, scoped, tag = 'internal scratch']
  #allocation2 [shape = 'f32[1,1]{1,0:T(1,128)S(6)}', space=smem, size = 0x200, scoped, tag = 'scoped memory for tpu_custom_call.1']
  %s0 = inlined_call_operand.vmem [shape: bf16[170,128], index: 0, kind: input, shape index: {}]
  %s1 = inlined_call_operand.vmem [shape: bf16[1400,170], index: 1, kind: input, shape index: {}]
  %s2 = inlined_call_operand.vmem [shape: f32[200,1], index: 2, kind: input, shape index: {}]
  %s3 = inlined_call_operand.<no memory space> [shape: f32[1,1], index: 3, kind: input, shape index: {}]
  %s4 = inlined_call_operand.hbm [shape: f32[1,128], index: 4, kind: output, shape index: {}]
  %s5 = sld [smem:[#allocation0]]
  $region26: #{tpu_custom_call.1} parent=0
    _
  %s7 = ssub.s32 1, %s5
  %s8 = scalar_select 0, %s7, %s5
  %9 = sst [smem:[#allocation2]] %s3
  $region1: #{tpu_custom_call.1} parent=0
    #allocation3 [shape = 'u8[512]{0}', space=vmem, size = 0x400, scoped, tag = 'output window, operand 0, single buffered']
    #allocation4 [shape = 's32[1]{0}', space=sflag, size = 0x4, scoped, tag = 'scoped memory for tpu_custom_call.1']
    %10 = vsyncpa [#allocation4], 0
    // Predicated region
    $region2: #{tpu_custom_call.1} parent=1 // pred_check
      _
    $region3: #{tpu_custom_call.1} parent=1 // pred_check_branch
      %12 = sbr.rel (0) target = $region5
    $region4: #{tpu_custom_call.1} parent=1 // pred_region
      _
    $region5: #{tpu_custom_call.1} parent=1 // pred_fallthru
      _
    // Predicated region
    $region6: #{tpu_custom_call.1} parent=1 // pred_check
      _
    $region7: #{tpu_custom_call.1} parent=1 // pred_check_branch
      %14 = sbr.rel (0) target = $region9
    $region8: #{tpu_custom_call.1} parent=1 // pred_region
      _
    $region9: #{tpu_custom_call.1} parent=1 // pred_fallthru
      _
    // Predicated region
    $region10: #{tpu_custom_call.1} parent=1 // pred_check
      _
    $region11: #{tpu_custom_call.1} parent=1 // pred_check_branch
      %16 = sbr.rel (0) target = $region13
    $region12: #{tpu_custom_call.1} parent=1 // pred_region
      _
    $region13: #{tpu_custom_call.1} parent=1 // pred_fallthru
      _
    // Predicated region
    $region14: #{tpu_custom_call.1} parent=1 // pred_check
      _
    $region15: #{tpu_custom_call.1} parent=1 // pred_check_branch
      %18 = sbr.rel (0) target = $region17
    $region16: #{tpu_custom_call.1} parent=1 // pred_region
      _
    $region17: #{tpu_custom_call.1} parent=1 // pred_fallthru
      _
    %v20 = vld [vmem:[%s0] sm:$0xf]
    %v21 = vld [vmem:[%s0 + $0x4] sm:$0xf]
    %v22 = vld [vmem:[%s0 + $0x8] sm:$0xf]
    %v23 = vld [vmem:[%s0 + $0xc] sm:$0xf]
    %v24 = vld [vmem:[%s0 + $0x10] sm:$0xf]
    %v25 = vld [vmem:[%s0 + $0x14] sm:$0xf]
    %v26 = vld [vmem:[%s0 + $0x18] sm:$0xf]
    %v27 = vld [vmem:[%s0 + $0x1c] sm:$0xf]
    %v28 = vld [vmem:[%s0 + $0x20] sm:$0xf]
    %v29 = vld [vmem:[%s0 + $0x24] sm:$0xf]
    %v30 = vld [vmem:[%s0 + $0x28] sm:$0xf]
    %v31 = vld [vmem:[%s0 + $0x2c] sm:$0xf]
    %v32 = vld [vmem:[%s0 + $0x30] sm:$0xf]
    %v33 = vld [vmem:[%s0 + $0x34] sm:$0xf]
    %v34 = vld [vmem:[%s0 + $0x38] sm:$0xf]
    %v35 = vld [vmem:[%s0 + $0x3c] sm:$0xf]
    %v36 = vld [vmem:[%s0 + $0x40] sm:$0xf]
    %v37 = vld [vmem:[%s0 + $0x44] sm:$0xf]
    %v38 = vld [vmem:[%s0 + $0x48] sm:$0xf]
    %v39 = vld [vmem:[%s0 + $0x4c] sm:$0xf]
    %v40 = vld [vmem:[%s0 + $0x50] sm:$0xf]
    %v41 = vld [vmem:[%s0 + $0x54] sm:$0x1]
    %v42 = vld [vmem:[%s1] sm:$0xff]
    %v43 = vld [vmem:[%s1 + $0x8] sm:$0xff]
    %v44 = vld [vmem:[%s1 + $0x10] sm:$0xff]
    %v45 = vld [vmem:[%s1 + $0x18] sm:$0xff]
    %v46 = vld [vmem:[%s1 + $0x20] sm:$0xff]
    %v47 = vld [vmem:[%s1 + $0x28] sm:$0xff]
    %v48 = vld [vmem:[%s1 + $0x30] sm:$0xff]
    %v49 = vld [vmem:[%s1 + $0x38] sm:$0xff]
    %v50 = vld [vmem:[%s1 + $0x40] sm:$0xff]
    %v51 = vld [vmem:[%s1 + $0x48] sm:$0xff]
    %v52 = vld [vmem:[%s1 + $0x50] sm:$0xff]
    %v53 = vld [vmem:[%s1 + $0x58] sm:$0xff]
    %v54 = vld [vmem:[%s1 + $0x60] sm:$0xff]
    %v55 = vld [vmem:[%s1 + $0x68] sm:$0xff]
    %v56 = vld [vmem:[%s1 + $0x70] sm:$0xff]
    %v57 = vld [vmem:[%s1 + $0x78] sm:$0xff]
    %v58 = vld [vmem:[%s1 + $0x80] sm:$0xff]
    %v59 = vld [vmem:[%s1 + $0x88] sm:$0xff]
    %v60 = vld [vmem:[%s1 + $0x90] sm:$0xff]
    %v61 = vld [vmem:[%s1 + $0x98] sm:$0xff]
    %v62 = vld [vmem:[%s1 + $0xa0] sm:$0xff]
    %v63 = vld [vmem:[%s1 + $0xa8] sm:$0xff]
    %v64 = vld [vmem:[%s1 + $0xb0] sm:$0xff]
    %v65 = vld [vmem:[%s1 + $0xb8] sm:$0xff]
    %v66 = vld [vmem:[%s1 + $0xc0] sm:$0xff]
    %v67 = vld [vmem:[%s1 + $0xc8] sm:$0xff]
    %v68 = vld [vmem:[%s1 + $0xd0] sm:$0xff]
    %v69 = vld [vmem:[%s1 + $0xd8] sm:$0xff]
    %v70 = vld [vmem:[%s1 + $0xe0] sm:$0xff]
    %v71 = vld [vmem:[%s1 + $0xe8] sm:$0xff]
    %v72 = vld [vmem:[%s1 + $0xf0] sm:$0xff]
    %v73 = vld [vmem:[%s1 + $0xf8] sm:$0xff]
    %v74 = vld [vmem:[%s1 + $0x100] sm:$0xff]
    %v75 = vld [vmem:[%s1 + $0x108] sm:$0xff]
    %v76 = vld [vmem:[%s1 + $0x110] sm:$0xff]
    %v77 = vld [vmem:[%s1 + $0x118] sm:$0xff]
    %v78 = vld [vmem:[%s1 + $0x120] sm:$0xff]
    %v79 = vld [vmem:[%s1 + $0x128] sm:$0xff]
    %v80 = vld [vmem:[%s1 + $0x130] sm:$0xff]
    %v81 = vld [vmem:[%s1 + $0x138] sm:$0xff]
    %v82 = vld [vmem:[%s1 + $0x140] sm:$0xff]
    %v83 = vld [vmem:[%s1 + $0x148] sm:$0xff]
    %v84 = vld [vmem:[%s1 + $0x150] sm:$0xff]
    %v85 = vld [vmem:[%s1 + $0x158] sm:$0xff]
    %v86 = vld [vmem:[%s1 + $0x160] sm:$0xff]
    %v87 = vld [vmem:[%s1 + $0x168] sm:$0xff]
    %v88 = vld [vmem:[%s1 + $0x170] sm:$0xff]
    %v89 = vld [vmem:[%s1 + $0x178] sm:$0xff]
    %v90 = vld [vmem:[%s1 + $0x180] sm:$0xff]
    %v91 = vld [vmem:[%s1 + $0x188] sm:$0xff]
    %v92 = vld [vmem:[%s1 + $0x190] sm:$0xff]
    %v93 = vld [vmem:[%s1 + $0x198] sm:$0xff]
    %v94 = vld [vmem:[%s1 + $0x1a0] sm:$0xff]
    %v95 = vld [vmem:[%s1 + $0x1a8] sm:$0xff]
    %v96 = vld [vmem:[%s1 + $0x1b0] sm:$0xff]
    %v97 = vld [vmem:[%s1 + $0x1b8] sm:$0xff]
    %v98 = vld [vmem:[%s1 + $0x1c0] sm:$0xff]
    %v99 = vld [vmem:[%s1 + $0x1c8] sm:$0xff]
    %v100 = vld [vmem:[%s1 + $0x1d0] sm:$0xff]
    %v101 = vld [vmem:[%s1 + $0x1d8] sm:$0xff]
    %v102 = vld [vmem:[%s1 + $0x1e0] sm:$0xff]
    %v103 = vld [vmem:[%s1 + $0x1e8] sm:$0xff]
    %v104 = vld [vmem:[%s1 + $0x1f0] sm:$0xff]
    %v105 = vld [vmem:[%s1 + $0x1f8] sm:$0xff]
    %v106 = vld [vmem:[%s1 + $0x200] sm:$0xff]
    %v107 = vld [vmem:[%s1 + $0x208] sm:$0xff]
    %v108 = vld [vmem:[%s1 + $0x210] sm:$0xff]
    %v109 = vld [vmem:[%s1 + $0x218] sm:$0xff]
    %v110 = vld [vmem:[%s1 + $0x220] sm:$0xff]
    %v111 = vld [vmem:[%s1 + $0x228] sm:$0xff]
    %v112 = vld [vmem:[%s1 + $0x230] sm:$0xff]
    %v113 = vld [vmem:[%s1 + $0x238] sm:$0xff]
    %v114 = vld [vmem:[%s1 + $0x240] sm:$0xff]
    %v115 = vld [vmem:[%s1 + $0x248] sm:$0xff]
    %v116 = vld [vmem:[%s1 + $0x250] sm:$0xff]
    %v117 = vld [vmem:[%s1 + $0x258] sm:$0xff]
    %v118 = vld [vmem:[%s1 + $0x260] sm:$0xff]
    %v119 = vld [vmem:[%s1 + $0x268] sm:$0xff]
    %v120 = vld [vmem:[%s1 + $0x270] sm:$0xff]
    %v121 = vld [vmem:[%s1 + $0x278] sm:$0xff]
    %v122 = vld [vmem:[%s1 + $0x280] sm:$0xff]
    %v123 = vld [vmem:[%s1 + $0x288] sm:$0xff]
    %v124 = vld [vmem:[%s1 + $0x290] sm:$0xff]
    %v125 = vld [vmem:[%s1 + $0x298] sm:$0xff]
    %v126 = vld [vmem:[%s1 + $0x2a0] sm:$0xff]
    %v127 = vld [vmem:[%s1 + $0x2a8] sm:$0xff]
    %v128 = vld [vmem:[%s1 + $0x2b0] sm:$0xff]
    %v129 = vld [vmem:[%s1 + $0x2b8] sm:$0xff]
    %v130 = vld [vmem:[%s1 + $0x2c0] sm:$0xff]
    %v131 = vld [vmem:[%s1 + $0x2c8] sm:$0xff]
    %v132 = vld [vmem:[%s1 + $0x2d0] sm:$0xff]
    %v133 = vld [vmem:[%s1 + $0x2d8] sm:$0xff]
    %v134 = vld [vmem:[%s1 + $0x2e0] sm:$0xff]
    %v135 = vld [vmem:[%s1 + $0x2e8] sm:$0xff]
    %v136 = vld [vmem:[%s1 + $0x2f0] sm:$0xff]
    %v137 = vld [vmem:[%s1 + $0x2f8] sm:$0xff]
    %v138 = vld [vmem:[%s1 + $0x300] sm:$0xff]
    %v139 = vld [vmem:[%s1 + $0x308] sm:$0xff]
    %v140 = vld [vmem:[%s1 + $0x310] sm:$0xff]
    %v141 = vld [vmem:[%s1 + $0x318] sm:$0xff]
    %v142 = vld [vmem:[%s1 + $0x320] sm:$0xff]
    %v143 = vld [vmem:[%s1 + $0x328] sm:$0xff]
    %v144 = vld [vmem:[%s1 + $0x330] sm:$0xff]
    %v145 = vld [vmem:[%s1 + $0x338] sm:$0xff]
    %v146 = vld [vmem:[%s1 + $0x340] sm:$0xff]
    %v147 = vld [vmem:[%s1 + $0x348] sm:$0xff]
    %v148 = vld [vmem:[%s1 + $0x350] sm:$0xff]
    %v149 = vld [vmem:[%s1 + $0x358] sm:$0xff]
    %v150 = vld [vmem:[%s1 + $0x360] sm:$0xff]
    %v151 = vld [vmem:[%s1 + $0x368] sm:$0xff]
    %v152 = vld [vmem:[%s1 + $0x370] sm:$0xff]
    %v153 = vld [vmem:[%s1 + $0x378] sm:$0xff]
    %v154 = vld [vmem:[%s1 + $0x380] sm:$0xff]
    %v155 = vld [vmem:[%s1 + $0x388] sm:$0xff]
    %v156 = vld [vmem:[%s1 + $0x390] sm:$0xff]
    %v157 = vld [vmem:[%s1 + $0x398] sm:$0xff]
    %v158 = vld [vmem:[%s1 + $0x3a0] sm:$0xff]
    %v159 = vld [vmem:[%s1 + $0x3a8] sm:$0xff]
    %v160 = vld [vmem:[%s1 + $0x3b0] sm:$0xff]
    %v161 = vld [vmem:[%s1 + $0x3b8] sm:$0xff]
    %v162 = vld [vmem:[%s1 + $0x3c0] sm:$0xff]
    %v163 = vld [vmem:[%s1 + $0x3c8] sm:$0xff]
    %v164 = vld [vmem:[%s1 + $0x3d0] sm:$0xff]
    %v165 = vld [vmem:[%s1 + $0x3d8] sm:$0xff]
    %v166 = vld [vmem:[%s1 + $0x3e0] sm:$0xff]
    %v167 = vld [vmem:[%s1 + $0x3e8] sm:$0xff]
    %v168 = vld [vmem:[%s1 + $0x3f0] sm:$0xff]
    %v169 = vld [vmem:[%s1 + $0x3f8] sm:$0xff]
    %v170 = vld [vmem:[%s1 + $0x400] sm:$0xff]
    %v171 = vld [vmem:[%s1 + $0x408] sm:$0xff]
    %v172 = vld [vmem:[%s1 + $0x410] sm:$0xff]
    %v173 = vld [vmem:[%s1 + $0x418] sm:$0xff]
    %v174 = vld [vmem:[%s1 + $0x420] sm:$0xff]
    %v175 = vld [vmem:[%s1 + $0x428] sm:$0xff]
    %v176 = vld [vmem:[%s1 + $0x430] sm:$0xff]
    %v177 = vld [vmem:[%s1 + $0x438] sm:$0xff]
    %v178 = vld [vmem:[%s1 + $0x440] sm:$0xff]
    %v179 = vld [vmem:[%s1 + $0x448] sm:$0xff]
    %v180 = vld [vmem:[%s1 + $0x450] sm:$0xff]
    %v181 = vld [vmem:[%s1 + $0x458] sm:$0xff]
    %v182 = vld [vmem:[%s1 + $0x460] sm:$0xff]
    %v183 = vld [vmem:[%s1 + $0x468] sm:$0xff]
    %v184 = vld [vmem:[%s1 + $0x470] sm:$0xff]
    %v185 = vld [vmem:[%s1 + $0x478] sm:$0xff]
    %v186 = vld [vmem:[%s1 + $0x480] sm:$0xff]
    %v187 = vld [vmem:[%s1 + $0x488] sm:$0xff]
    %v188 = vld [vmem:[%s1 + $0x490] sm:$0xff]
    %v189 = vld [vmem:[%s1 + $0x498] sm:$0xff]
    %v190 = vld [vmem:[%s1 + $0x4a0] sm:$0xff]
    %v191 = vld [vmem:[%s1 + $0x4a8] sm:$0xff]
    %v192 = vld [vmem:[%s1 + $0x4b0] sm:$0xff]
    %v193 = vld [vmem:[%s1 + $0x4b8] sm:$0xff]
    %v194 = vld [vmem:[%s1 + $0x4c0] sm:$0xff]
    %v195 = vld [vmem:[%s1 + $0x4c8] sm:$0xff]
    %v196 = vld [vmem:[%s1 + $0x4d0] sm:$0xff]
    %v197 = vld [vmem:[%s1 + $0x4d8] sm:$0xff]
    %v198 = vld [vmem:[%s1 + $0x4e0] sm:$0xff]
    %v199 = vld [vmem:[%s1 + $0x4e8] sm:$0xff]
    %v200 = vld [vmem:[%s1 + $0x4f0] sm:$0xff]
    %v201 = vld [vmem:[%s1 + $0x4f8] sm:$0xff]
    %v202 = vld [vmem:[%s1 + $0x500] sm:$0xff]
    %v203 = vld [vmem:[%s1 + $0x508] sm:$0xff]
    %v204 = vld [vmem:[%s1 + $0x510] sm:$0xff]
    %v205 = vld [vmem:[%s1 + $0x518] sm:$0xff]
    %v206 = vld [vmem:[%s1 + $0x520] sm:$0xff]
    %v207 = vld [vmem:[%s1 + $0x528] sm:$0xff]
    %v208 = vld [vmem:[%s1 + $0x530] sm:$0xff]
    %v209 = vld [vmem:[%s1 + $0x538] sm:$0xff]
    %v210 = vld [vmem:[%s1 + $0x540] sm:$0xff]
    %v211 = vld [vmem:[%s1 + $0x548] sm:$0xff]
    %v212 = vld [vmem:[%s1 + $0x550] sm:$0xff]
    %v213 = vld [vmem:[%s1 + $0x558] sm:$0xff]
    %v214 = vld [vmem:[%s1 + $0x560] sm:$0xff]
    %v215 = vld [vmem:[%s1 + $0x568] sm:$0xff]
    %v216 = vld [vmem:[%s1 + $0x570] sm:$0xff]
    %v392 = vunpack.c.l.b16 %v42
    %v393 = vunpack.c.h.b16 %v42
    %v394 = vunpack.c.l.b16 %v43
    %v395 = vunpack.c.h.b16 %v43
    %v396 = vunpack.c.l.b16 %v44
    %v397 = vunpack.c.h.b16 %v44
    %v398 = vunpack.c.l.b16 %v45
    %v399 = vunpack.c.h.b16 %v45
    %v400 = vunpack.c.l.b16 %v46
    %v401 = vunpack.c.h.b16 %v46
    %v402 = vunpack.c.l.b16 %v47
    %v403 = vunpack.c.h.b16 %v47
    %v404 = vunpack.c.l.b16 %v48
    %v405 = vunpack.c.h.b16 %v48
    %v406 = vunpack.c.l.b16 %v49
    %v407 = vunpack.c.h.b16 %v49
    %v408 = vunpack.c.l.b16 %v50
    %v409 = vunpack.c.h.b16 %v50
    %v410 = vunpack.c.l.b16 %v51
    %v411 = vunpack.c.h.b16 %v51
    %v412 = vunpack.c.l.b16 %v52
    %v413 = vunpack.c.h.b16 %v52
    %v414 = vunpack.c.l.b16 %v53
    %v415 = vunpack.c.h.b16 %v53
    %v416 = vunpack.c.l.b16 %v54
    %v417 = vunpack.c.h.b16 %v54
    %v418 = vunpack.c.l.b16 %v55
    %v419 = vunpack.c.h.b16 %v55
    %v420 = vunpack.c.l.b16 %v56
    %v421 = vunpack.c.h.b16 %v56
    %v422 = vunpack.c.l.b16 %v57
    %v423 = vunpack.c.h.b16 %v57
    %v424 = vunpack.c.l.b16 %v58
    %v425 = vunpack.c.h.b16 %v58
    %v426 = vunpack.c.l.b16 %v59
    %v427 = vunpack.c.h.b16 %v59
    %v428 = vunpack.c.l.b16 %v60
    %v429 = vunpack.c.h.b16 %v60
    %v430 = vunpack.c.l.b16 %v61
    %v431 = vunpack.c.h.b16 %v61
    %v432 = vunpack.c.l.b16 %v62
    %v433 = vunpack.c.h.b16 %v62
    %v434 = vunpack.c.l.b16 %v63
    %v435 = vunpack.c.h.b16 %v63
    %v436 = vunpack.c.l.b16 %v64
    %v437 = vunpack.c.h.b16 %v64
    %v438 = vunpack.c.l.b16 %v65
    %v439 = vunpack.c.h.b16 %v65
    %v440 = vunpack.c.l.b16 %v66
    %v441 = vunpack.c.h.b16 %v66
    %v442 = vunpack.c.l.b16 %v67
    %v443 = vunpack.c.h.b16 %v67
    %v444 = vunpack.c.l.b16 %v68
    %v445 = vunpack.c.h.b16 %v68
    %v446 = vunpack.c.l.b16 %v69
    %v447 = vunpack.c.h.b16 %v69
    %v448 = vunpack.c.l.b16 %v70
    %v449 = vunpack.c.h.b16 %v70
    %v450 = vunpack.c.l.b16 %v71
    %v451 = vunpack.c.h.b16 %v71
    %v452 = vunpack.c.l.b16 %v72
    %v453 = vunpack.c.h.b16 %v72
    %v454 = vunpack.c.l.b16 %v73
    %v455 = vunpack.c.h.b16 %v73
    %v456 = vunpack.c.l.b16 %v74
    %v457 = vunpack.c.h.b16 %v74
    %v458 = vunpack.c.l.b16 %v75
    %v459 = vunpack.c.h.b16 %v75
    %v460 = vunpack.c.l.b16 %v76
    %v461 = vunpack.c.h.b16 %v76
    %v462 = vunpack.c.l.b16 %v77
    %v463 = vunpack.c.h.b16 %v77
    %v464 = vunpack.c.l.b16 %v78
    %v465 = vunpack.c.h.b16 %v78
    %v466 = vunpack.c.l.b16 %v79
    %v467 = vunpack.c.h.b16 %v79
    %v468 = vunpack.c.l.b16 %v80
    %v469 = vunpack.c.h.b16 %v80
    %v470 = vunpack.c.l.b16 %v81
    %v471 = vunpack.c.h.b16 %v81
    %v472 = vunpack.c.l.b16 %v82
    %v473 = vunpack.c.h.b16 %v82
    %v474 = vunpack.c.l.b16 %v83
    %v475 = vunpack.c.h.b16 %v83
    %v476 = vunpack.c.l.b16 %v84
    %v477 = vunpack.c.h.b16 %v84
    %v478 = vunpack.c.l.b16 %v85
    %v479 = vunpack.c.h.b16 %v85
    %v480 = vunpack.c.l.b16 %v86
    %v481 = vunpack.c.h.b16 %v86
    %v482 = vunpack.c.l.b16 %v87
    %v483 = vunpack.c.h.b16 %v87
    %v484 = vunpack.c.l.b16 %v88
    %v485 = vunpack.c.h.b16 %v88
    %v486 = vunpack.c.l.b16 %v89
    %v487 = vunpack.c.h.b16 %v89
    %v488 = vunpack.c.l.b16 %v90
    %v489 = vunpack.c.h.b16 %v90
    %v490 = vunpack.c.l.b16 %v91
    %v491 = vunpack.c.h.b16 %v91
    %v492 = vunpack.c.l.b16 %v92
    %v493 = vunpack.c.h.b16 %v92
    %v494 = vunpack.c.l.b16 %v93
    %v495 = vunpack.c.h.b16 %v93
    %v496 = vunpack.c.l.b16 %v94
    %v497 = vunpack.c.h.b16 %v94
    %v498 = vunpack.c.l.b16 %v95
    %v499 = vunpack.c.h.b16 %v95
    %v500 = vunpack.c.l.b16 %v96
    %v501 = vunpack.c.h.b16 %v96
    %v502 = vunpack.c.l.b16 %v97
    %v503 = vunpack.c.h.b16 %v97
    %v504 = vunpack.c.l.b16 %v98
    %v505 = vunpack.c.h.b16 %v98
    %v506 = vunpack.c.l.b16 %v99
    %v507 = vunpack.c.h.b16 %v99
    %v508 = vunpack.c.l.b16 %v100
    %v509 = vunpack.c.h.b16 %v100
    %v510 = vunpack.c.l.b16 %v101
    %v511 = vunpack.c.h.b16 %v101
    %v512 = vunpack.c.l.b16 %v102
    %v513 = vunpack.c.h.b16 %v102
    %v514 = vunpack.c.l.b16 %v103
    %v515 = vunpack.c.h.b16 %v103
    %v516 = vunpack.c.l.b16 %v104
    %v517 = vunpack.c.h.b16 %v104
    %v518 = vunpack.c.l.b16 %v105
    %v519 = vunpack.c.h.b16 %v105
    %v520 = vunpack.c.l.b16 %v106
    %v521 = vunpack.c.h.b16 %v106
    %v522 = vunpack.c.l.b16 %v107
    %v523 = vunpack.c.h.b16 %v107
    %v524 = vunpack.c.l.b16 %v108
    %v525 = vunpack.c.h.b16 %v108
    %v526 = vunpack.c.l.b16 %v109
    %v527 = vunpack.c.h.b16 %v109
    %v528 = vunpack.c.l.b16 %v110
    %v529 = vunpack.c.h.b16 %v110
    %v530 = vunpack.c.l.b16 %v111
    %v531 = vunpack.c.h.b16 %v111
    %v532 = vunpack.c.l.b16 %v112
    %v533 = vunpack.c.h.b16 %v112
    %v534 = vunpack.c.l.b16 %v113
    %v535 = vunpack.c.h.b16 %v113
    %v536 = vunpack.c.l.b16 %v114
    %v537 = vunpack.c.h.b16 %v114
    %v538 = vunpack.c.l.b16 %v115
    %v539 = vunpack.c.h.b16 %v115
    %v540 = vunpack.c.l.b16 %v116
    %v541 = vunpack.c.h.b16 %v116
    %v542 = vunpack.c.l.b16 %v117
    %v543 = vunpack.c.h.b16 %v117
    %v544 = vunpack.c.l.b16 %v118
    %v545 = vunpack.c.h.b16 %v118
    %v546 = vunpack.c.l.b16 %v119
    %v547 = vunpack.c.h.b16 %v119
    %v548 = vunpack.c.l.b16 %v120
    %v549 = vunpack.c.h.b16 %v120
    %v550 = vunpack.c.l.b16 %v121
    %v551 = vunpack.c.h.b16 %v121
    %v552 = vunpack.c.l.b16 %v122
    %v553 = vunpack.c.h.b16 %v122
    %v554 = vunpack.c.l.b16 %v123
    %v555 = vunpack.c.h.b16 %v123
    %v556 = vunpack.c.l.b16 %v124
    %v557 = vunpack.c.h.b16 %v124
    %v558 = vunpack.c.l.b16 %v125
    %v559 = vunpack.c.h.b16 %v125
    %v560 = vunpack.c.l.b16 %v126
    %v561 = vunpack.c.h.b16 %v126
    %v562 = vunpack.c.l.b16 %v127
    %v563 = vunpack.c.h.b16 %v127
    %v564 = vunpack.c.l.b16 %v128
    %v565 = vunpack.c.h.b16 %v128
    %v566 = vunpack.c.l.b16 %v129
    %v567 = vunpack.c.h.b16 %v129
    %v568 = vunpack.c.l.b16 %v130
    %v569 = vunpack.c.h.b16 %v130
    %v570 = vunpack.c.l.b16 %v131
    %v571 = vunpack.c.h.b16 %v131
    %v572 = vunpack.c.l.b16 %v132
    %v573 = vunpack.c.h.b16 %v132
    %v574 = vunpack.c.l.b16 %v133
    %v575 = vunpack.c.h.b16 %v133
    %v576 = vunpack.c.l.b16 %v134
    %v577 = vunpack.c.h.b16 %v134
    %v578 = vunpack.c.l.b16 %v135
    %v579 = vunpack.c.h.b16 %v135
    %v580 = vunpack.c.l.b16 %v136
    %v581 = vunpack.c.h.b16 %v136
    %v582 = vunpack.c.l.b16 %v137
    %v583 = vunpack.c.h.b16 %v137
    %v584 = vunpack.c.l.b16 %v138
    %v585 = vunpack.c.h.b16 %v138
    %v586 = vunpack.c.l.b16 %v139
    %v587 = vunpack.c.h.b16 %v139
    %v588 = vunpack.c.l.b16 %v140
    %v589 = vunpack.c.h.b16 %v140
    %v590 = vunpack.c.l.b16 %v141
    %v591 = vunpack.c.h.b16 %v141
    %v592 = vunpack.c.l.b16 %v142
    %v593 = vunpack.c.h.b16 %v142
    %v594 = vunpack.c.l.b16 %v143
    %v595 = vunpack.c.h.b16 %v143
    %v596 = vunpack.c.l.b16 %v144
    %v597 = vunpack.c.h.b16 %v144
    %v598 = vunpack.c.l.b16 %v145
    %v599 = vunpack.c.h.b16 %v145
    %v600 = vunpack.c.l.b16 %v146
    %v601 = vunpack.c.h.b16 %v146
    %v602 = vunpack.c.l.b16 %v147
    %v603 = vunpack.c.h.b16 %v147
    %v604 = vunpack.c.l.b16 %v148
    %v605 = vunpack.c.h.b16 %v148
    %v606 = vunpack.c.l.b16 %v149
    %v607 = vunpack.c.h.b16 %v149
    %v608 = vunpack.c.l.b16 %v150
    %v609 = vunpack.c.h.b16 %v150
    %v610 = vunpack.c.l.b16 %v151
    %v611 = vunpack.c.h.b16 %v151
    %v612 = vunpack.c.l.b16 %v152
    %v613 = vunpack.c.h.b16 %v152
    %v614 = vunpack.c.l.b16 %v153
    %v615 = vunpack.c.h.b16 %v153
    %v616 = vunpack.c.l.b16 %v154
    %v617 = vunpack.c.h.b16 %v154
    %v618 = vunpack.c.l.b16 %v155
    %v619 = vunpack.c.h.b16 %v155
    %v620 = vunpack.c.l.b16 %v156
    %v621 = vunpack.c.h.b16 %v156
    %v622 = vunpack.c.l.b16 %v157
    %v623 = vunpack.c.h.b16 %v157
    %v624 = vunpack.c.l.b16 %v158
    %v625 = vunpack.c.h.b16 %v158
    %v626 = vunpack.c.l.b16 %v159
    %v627 = vunpack.c.h.b16 %v159
    %v628 = vunpack.c.l.b16 %v160
    %v629 = vunpack.c.h.b16 %v160
    %v630 = vunpack.c.l.b16 %v161
    %v631 = vunpack.c.h.b16 %v161
    %v632 = vunpack.c.l.b16 %v162
    %v633 = vunpack.c.h.b16 %v162
    %v634 = vunpack.c.l.b16 %v163
    %v635 = vunpack.c.h.b16 %v163
    %v636 = vunpack.c.l.b16 %v164
    %v637 = vunpack.c.h.b16 %v164
    %v638 = vunpack.c.l.b16 %v165
    %v639 = vunpack.c.h.b16 %v165
    %v640 = vunpack.c.l.b16 %v166
    %v641 = vunpack.c.h.b16 %v166
    %v642 = vunpack.c.l.b16 %v167
    %v643 = vunpack.c.h.b16 %v167
    %v644 = vunpack.c.l.b16 %v168
    %v645 = vunpack.c.h.b16 %v168
    %v646 = vunpack.c.l.b16 %v169
    %v647 = vunpack.c.h.b16 %v169
    %v648 = vunpack.c.l.b16 %v170
    %v649 = vunpack.c.h.b16 %v170
    %v650 = vunpack.c.l.b16 %v171
    %v651 = vunpack.c.h.b16 %v171
    %v652 = vunpack.c.l.b16 %v172
    %v653 = vunpack.c.h.b16 %v172
    %v654 = vunpack.c.l.b16 %v173
    %v655 = vunpack.c.h.b16 %v173
    %v656 = vunpack.c.l.b16 %v174
    %v657 = vunpack.c.h.b16 %v174
    %v658 = vunpack.c.l.b16 %v175
    %v659 = vunpack.c.h.b16 %v175
    %v660 = vunpack.c.l.b16 %v176
    %v661 = vunpack.c.h.b16 %v176
    %v662 = vunpack.c.l.b16 %v177
    %v663 = vunpack.c.h.b16 %v177
    %v664 = vunpack.c.l.b16 %v178
    %v665 = vunpack.c.h.b16 %v178
    %v666 = vunpack.c.l.b16 %v179
    %v667 = vunpack.c.h.b16 %v179
    %v668 = vunpack.c.l.b16 %v180
    %v669 = vunpack.c.h.b16 %v180
    %v670 = vunpack.c.l.b16 %v181
    %v671 = vunpack.c.h.b16 %v181
    %v672 = vunpack.c.l.b16 %v182
    %v673 = vunpack.c.h.b16 %v182
    %v674 = vunpack.c.l.b16 %v183
    %v675 = vunpack.c.h.b16 %v183
    %v676 = vunpack.c.l.b16 %v184
    %v677 = vunpack.c.h.b16 %v184
    %v678 = vunpack.c.l.b16 %v185
    %v679 = vunpack.c.h.b16 %v185
    %v680 = vunpack.c.l.b16 %v186
    %v681 = vunpack.c.h.b16 %v186
    %v682 = vunpack.c.l.b16 %v187
    %v683 = vunpack.c.h.b16 %v187
    %v684 = vunpack.c.l.b16 %v188
    %v685 = vunpack.c.h.b16 %v188
    %v686 = vunpack.c.l.b16 %v189
    %v687 = vunpack.c.h.b16 %v189
    %v688 = vunpack.c.l.b16 %v190
    %v689 = vunpack.c.h.b16 %v190
    %v690 = vunpack.c.l.b16 %v191
    %v691 = vunpack.c.h.b16 %v191
    %v692 = vunpack.c.l.b16 %v192
    %v693 = vunpack.c.h.b16 %v192
    %v694 = vunpack.c.l.b16 %v193
    %v695 = vunpack.c.h.b16 %v193
    %v696 = vunpack.c.l.b16 %v194
    %v697 = vunpack.c.h.b16 %v194
    %v698 = vunpack.c.l.b16 %v195
    %v699 = vunpack.c.h.b16 %v195
    %v700 = vunpack.c.l.b16 %v196
    %v701 = vunpack.c.h.b16 %v196
    %v702 = vunpack.c.l.b16 %v197
    %v703 = vunpack.c.h.b16 %v197
    %v704 = vunpack.c.l.b16 %v198
    %v705 = vunpack.c.h.b16 %v198
    %v706 = vunpack.c.l.b16 %v199
    %v707 = vunpack.c.h.b16 %v199
    %v708 = vunpack.c.l.b16 %v200
    %v709 = vunpack.c.h.b16 %v200
    %v710 = vunpack.c.l.b16 %v201
    %v711 = vunpack.c.h.b16 %v201
    %v712 = vunpack.c.l.b16 %v202
    %v713 = vunpack.c.h.b16 %v202
    %v714 = vunpack.c.l.b16 %v203
    %v715 = vunpack.c.h.b16 %v203
    %v716 = vunpack.c.l.b16 %v204
    %v717 = vunpack.c.h.b16 %v204
    %v718 = vunpack.c.l.b16 %v205
    %v719 = vunpack.c.h.b16 %v205
    %v720 = vunpack.c.l.b16 %v206
    %v721 = vunpack.c.h.b16 %v206
    %v722 = vunpack.c.l.b16 %v207
    %v723 = vunpack.c.h.b16 %v207
    %v724 = vunpack.c.l.b16 %v208
    %v725 = vunpack.c.h.b16 %v208
    %v726 = vunpack.c.l.b16 %v209
    %v727 = vunpack.c.h.b16 %v209
    %v728 = vunpack.c.l.b16 %v210
    %v729 = vunpack.c.h.b16 %v210
    %v730 = vunpack.c.l.b16 %v211
    %v731 = vunpack.c.h.b16 %v211
    %v732 = vunpack.c.l.b16 %v212
    %v733 = vunpack.c.h.b16 %v212
    %v734 = vunpack.c.l.b16 %v213
    %v735 = vunpack.c.h.b16 %v213
    %v736 = vunpack.c.l.b16 %v214
    %v737 = vunpack.c.h.b16 %v214
    %v738 = vunpack.c.l.b16 %v215
    %v739 = vunpack.c.h.b16 %v215
    %v740 = vunpack.c.l.b16 %v216
    %v741 = vunpack.c.h.b16 %v216
    %v742 = vpack.c.b16 %v394, %v392
    %v743 = vpack.c.b16 %v395, %v393
    %v744 = vpack.c.b16 %v398, %v396
    %v745 = vpack.c.b16 %v399, %v397
    %v746 = vpack.c.b16 %v402, %v400
    %v747 = vpack.c.b16 %v403, %v401
    %v748 = vpack.c.b16 %v406, %v404
    %v749 = vpack.c.b16 %v407, %v405
    %v750 = vpack.c.b16 %v410, %v408
    %v751 = vpack.c.b16 %v411, %v409
    %v752 = vpack.c.b16 %v414, %v412
    %v753 = vpack.c.b16 %v415, %v413
    %v754 = vpack.c.b16 %v418, %v416
    %v755 = vpack.c.b16 %v419, %v417
    %v756 = vpack.c.b16 %v422, %v420
    %v757 = vpack.c.b16 %v423, %v421
    %v758 = vpack.c.b16 %v426, %v424
    %v759 = vpack.c.b16 %v427, %v425
    %v760 = vpack.c.b16 %v430, %v428
    %v761 = vpack.c.b16 %v431, %v429
    %v762 = vpack.c.b16 %v434, %v432
    %v763 = vpack.c.b16 %v435, %v433
    %v764 = vpack.c.b16 %v438, %v436
    %v765 = vpack.c.b16 %v439, %v437
    %v766 = vpack.c.b16 %v442, %v440
    %v767 = vpack.c.b16 %v443, %v441
    %v768 = vpack.c.b16 %v446, %v444
    %v769 = vpack.c.b16 %v447, %v445
    %v770 = vpack.c.b16 %v450, %v448
    %v771 = vpack.c.b16 %v451, %v449
    %v772 = vpack.c.b16 %v454, %v452
    %v773 = vpack.c.b16 %v455, %v453
    %v774 = vpack.c.b16 %v458, %v456
    %v775 = vpack.c.b16 %v459, %v457
    %v776 = vpack.c.b16 %v462, %v460
    %v777 = vpack.c.b16 %v463, %v461
    %v778 = vpack.c.b16 %v466, %v464
    %v779 = vpack.c.b16 %v467, %v465
    %v780 = vpack.c.b16 %v470, %v468
    %v781 = vpack.c.b16 %v471, %v469
    %v782 = vpack.c.b16 %v474, %v472
    %v783 = vpack.c.b16 %v475, %v473
    %v784 = vpack.c.b16 %v478, %v476
    %v785 = vpack.c.b16 %v479, %v477
    %v786 = vpack.c.b16 %v482, %v480
    %v787 = vpack.c.b16 %v483, %v481
    %v788 = vpack.c.b16 %v486, %v484
    %v789 = vpack.c.b16 %v487, %v485
    %v790 = vpack.c.b16 %v490, %v488
    %v791 = vpack.c.b16 %v491, %v489
    %v792 = vpack.c.b16 %v494, %v492
    %v793 = vpack.c.b16 %v495, %v493
    %v794 = vpack.c.b16 %v498, %v496
    %v795 = vpack.c.b16 %v499, %v497
    %v796 = vpack.c.b16 %v502, %v500
    %v797 = vpack.c.b16 %v503, %v501
    %v798 = vpack.c.b16 %v506, %v504
    %v799 = vpack.c.b16 %v507, %v505
    %v800 = vpack.c.b16 %v510, %v508
    %v801 = vpack.c.b16 %v511, %v509
    %v802 = vpack.c.b16 %v514, %v512
    %v803 = vpack.c.b16 %v515, %v513
    %v804 = vpack.c.b16 %v518, %v516
    %v805 = vpack.c.b16 %v519, %v517
    %v806 = vpack.c.b16 %v522, %v520
    %v807 = vpack.c.b16 %v523, %v521
    %v808 = vpack.c.b16 %v526, %v524
    %v809 = vpack.c.b16 %v527, %v525
    %v810 = vpack.c.b16 %v530, %v528
    %v811 = vpack.c.b16 %v531, %v529
    %v812 = vpack.c.b16 %v534, %v532
    %v813 = vpack.c.b16 %v535, %v533
    %v814 = vpack.c.b16 %v538, %v536
    %v815 = vpack.c.b16 %v539, %v537
    %v816 = vpack.c.b16 %v542, %v540
    %v817 = vpack.c.b16 %v543, %v541
    %v818 = vpack.c.b16 %v546, %v544
    %v819 = vpack.c.b16 %v547, %v545
    %v820 = vpack.c.b16 %v550, %v548
    %v821 = vpack.c.b16 %v551, %v549
    %v822 = vpack.c.b16 %v554, %v552
    %v823 = vpack.c.b16 %v555, %v553
    %v824 = vpack.c.b16 %v558, %v556
    %v825 = vpack.c.b16 %v559, %v557
    %v826 = vpack.c.b16 %v562, %v560
    %v827 = vpack.c.b16 %v563, %v561
    %v828 = vpack.c.b16 %v566, %v564
    %v829 = vpack.c.b16 %v567, %v565
    %v830 = vpack.c.b16 %v570, %v568
    %v831 = vpack.c.b16 %v571, %v569
    %v832 = vpack.c.b16 %v574, %v572
    %v833 = vpack.c.b16 %v575, %v573
    %v834 = vpack.c.b16 %v578, %v576
    %v835 = vpack.c.b16 %v579, %v577
    %v836 = vpack.c.b16 %v582, %v580
    %v837 = vpack.c.b16 %v583, %v581
    %v838 = vpack.c.b16 %v586, %v584
    %v839 = vpack.c.b16 %v587, %v585
    %v840 = vpack.c.b16 %v590, %v588
    %v841 = vpack.c.b16 %v591, %v589
    %v842 = vpack.c.b16 %v594, %v592
    %v843 = vpack.c.b16 %v595, %v593
    %v844 = vpack.c.b16 %v598, %v596
    %v845 = vpack.c.b16 %v599, %v597
    %v846 = vpack.c.b16 %v602, %v600
    %v847 = vpack.c.b16 %v603, %v601
    %v848 = vpack.c.b16 %v606, %v604
    %v849 = vpack.c.b16 %v607, %v605
    %v850 = vpack.c.b16 %v610, %v608
    %v851 = vpack.c.b16 %v611, %v609
    %v852 = vpack.c.b16 %v614, %v612
    %v853 = vpack.c.b16 %v615, %v613
    %v854 = vpack.c.b16 %v618, %v616
    %v855 = vpack.c.b16 %v619, %v617
    %v856 = vpack.c.b16 %v622, %v620
    %v857 = vpack.c.b16 %v623, %v621
    %v858 = vpack.c.b16 %v626, %v624
    %v859 = vpack.c.b16 %v627, %v625
    %v860 = vpack.c.b16 %v630, %v628
    %v861 = vpack.c.b16 %v631, %v629
    %v862 = vpack.c.b16 %v634, %v632
    %v863 = vpack.c.b16 %v635, %v633
    %v864 = vpack.c.b16 %v638, %v636
    %v865 = vpack.c.b16 %v639, %v637
    %v866 = vpack.c.b16 %v642, %v640
    %v867 = vpack.c.b16 %v643, %v641
    %v868 = vpack.c.b16 %v646, %v644
    %v869 = vpack.c.b16 %v647, %v645
    %v870 = vpack.c.b16 %v650, %v648
    %v871 = vpack.c.b16 %v651, %v649
    %v872 = vpack.c.b16 %v654, %v652
    %v873 = vpack.c.b16 %v655, %v653
    %v874 = vpack.c.b16 %v658, %v656
    %v875 = vpack.c.b16 %v659, %v657
    %v876 = vpack.c.b16 %v662, %v660
    %v877 = vpack.c.b16 %v663, %v661
    %v878 = vpack.c.b16 %v666, %v664
    %v879 = vpack.c.b16 %v667, %v665
    %v880 = vpack.c.b16 %v670, %v668
    %v881 = vpack.c.b16 %v671, %v669
    %v882 = vpack.c.b16 %v674, %v672
    %v883 = vpack.c.b16 %v675, %v673
    %v884 = vpack.c.b16 %v678, %v676
    %v885 = vpack.c.b16 %v679, %v677
    %v886 = vpack.c.b16 %v682, %v680
    %v887 = vpack.c.b16 %v683, %v681
    %v888 = vpack.c.b16 %v686, %v684
    %v889 = vpack.c.b16 %v687, %v685
    %v890 = vpack.c.b16 %v690, %v688
    %v891 = vpack.c.b16 %v691, %v689
    %v892 = vpack.c.b16 %v694, %v692
    %v893 = vpack.c.b16 %v695, %v693
    %v894 = vpack.c.b16 %v698, %v696
    %v895 = vpack.c.b16 %v699, %v697
    %v896 = vpack.c.b16 %v702, %v700
    %v897 = vpack.c.b16 %v703, %v701
    %v898 = vpack.c.b16 %v706, %v704
    %v899 = vpack.c.b16 %v707, %v705
    %v900 = vpack.c.b16 %v710, %v708
    %v901 = vpack.c.b16 %v711, %v709
    %v902 = vpack.c.b16 %v714, %v712
    %v903 = vpack.c.b16 %v715, %v713
    %v904 = vpack.c.b16 %v718, %v716
    %v905 = vpack.c.b16 %v719, %v717
    %v906 = vpack.c.b16 %v722, %v720
    %v907 = vpack.c.b16 %v723, %v721
    %v908 = vpack.c.b16 %v726, %v724
    %v909 = vpack.c.b16 %v727, %v725
    %v910 = vpack.c.b16 %v730, %v728
    %v911 = vpack.c.b16 %v731, %v729
    %v912 = vpack.c.b16 %v734, %v732
    %v913 = vpack.c.b16 %v735, %v733
    %v914 = vpack.c.b16 %v738, %v736
    %v915 = vpack.c.b16 %v739, %v737
    %v916 = vpack.c.b16 %v740, %v740
    %v917 = vpack.c.b16 %v741, %v741
    %v1028 = vunpack.c.l.b16 %v20
    %v1029 = vunpack.c.l.b16 %v21
    %v1030 = vunpack.c.l.b16 %v22
    %v1031 = vunpack.c.l.b16 %v23
    %v1032 = vunpack.c.l.b16 %v24
    %v1033 = vunpack.c.l.b16 %v25
    %v1034 = vunpack.c.l.b16 %v26
    %v1035 = vunpack.c.l.b16 %v27
    %v1036 = vunpack.c.l.b16 %v28
    %v1037 = vunpack.c.l.b16 %v29
    %v1038 = vunpack.c.l.b16 %v30
    %v1039 = vunpack.c.l.b16 %v31
    %v1040 = vunpack.c.l.b16 %v32
    %v1041 = vunpack.c.l.b16 %v33
    %v1042 = vunpack.c.l.b16 %v34
    %v1043 = vunpack.c.l.b16 %v35
    %v1044 = vunpack.c.l.b16 %v36
    %v1045 = vunpack.c.l.b16 %v37
    %v1046 = vunpack.c.l.b16 %v38
    %v1047 = vunpack.c.l.b16 %v39
    %v1048 = vunpack.c.l.b16 %v40
    %v1049 = vunpack.c.l.b16 %v41
    %v1050 = vpack.c.b16 %v1029, %v1028
    %v1051 = vpack.c.b16 %v1031, %v1030
    %v1052 = vpack.c.b16 %v1033, %v1032
    %v1053 = vpack.c.b16 %v1035, %v1034
    %v1054 = vpack.c.b16 %v1037, %v1036
    %v1055 = vpack.c.b16 %v1039, %v1038
    %v1056 = vpack.c.b16 %v1041, %v1040
    %v1057 = vpack.c.b16 %v1043, %v1042
    %v1058 = vpack.c.b16 %v1045, %v1044
    %v1059 = vpack.c.b16 %v1047, %v1046
    %v1060 = vpack.c.b16 %v1049, %v1048
    %vm1071 = vcmask 343040
    %v1073 = vsel %vm1071, %v743, 0
    %v1076 = vsel %vm1071, %v745, 0
    %v1079 = vsel %vm1071, %v747, 0
    %v1082 = vsel %vm1071, %v749, 0
    %v1085 = vsel %vm1071, %v751, 0
    %v1088 = vsel %vm1071, %v753, 0
    %v1091 = vsel %vm1071, %v755, 0
    %v1094 = vsel %vm1071, %v757, 0
    %v1097 = vsel %vm1071, %v759, 0
    %v1100 = vsel %vm1071, %v761, 0
    %v1103 = vsel %vm1071, %v763, 0
    %v1106 = vsel %vm1071, %v765, 0
    %v1109 = vsel %vm1071, %v767, 0
    %v1112 = vsel %vm1071, %v769, 0
    %v1115 = vsel %vm1071, %v771, 0
    %v1118 = vsel %vm1071, %v773, 0
    %v1121 = vsel %vm1071, %v775, 0
    %v1124 = vsel %vm1071, %v777, 0
    %v1127 = vsel %vm1071, %v779, 0
    %v1130 = vsel %vm1071, %v781, 0
    %v1133 = vsel %vm1071, %v783, 0
    %v1136 = vsel %vm1071, %v785, 0
    %v1139 = vsel %vm1071, %v787, 0
    %v1142 = vsel %vm1071, %v789, 0
    %v1145 = vsel %vm1071, %v791, 0
    %v1148 = vsel %vm1071, %v793, 0
    %v1151 = vsel %vm1071, %v795, 0
    %v1154 = vsel %vm1071, %v797, 0
    %v1157 = vsel %vm1071, %v799, 0
    %v1160 = vsel %vm1071, %v801, 0
    %v1163 = vsel %vm1071, %v803, 0
    %v1166 = vsel %vm1071, %v805, 0
    %v1169 = vsel %vm1071, %v807, 0
    %v1172 = vsel %vm1071, %v809, 0
    %v1175 = vsel %vm1071, %v811, 0
    %v1178 = vsel %vm1071, %v813, 0
    %v1181 = vsel %vm1071, %v815, 0
    %v1184 = vsel %vm1071, %v817, 0
    %v1187 = vsel %vm1071, %v819, 0
    %v1190 = vsel %vm1071, %v821, 0
    %v1193 = vsel %vm1071, %v823, 0
    %v1196 = vsel %vm1071, %v825, 0
    %v1199 = vsel %vm1071, %v827, 0
    %v1202 = vsel %vm1071, %v829, 0
    %v1205 = vsel %vm1071, %v831, 0
    %v1208 = vsel %vm1071, %v833, 0
    %v1211 = vsel %vm1071, %v835, 0
    %v1214 = vsel %vm1071, %v837, 0
    %v1217 = vsel %vm1071, %v839, 0
    %v1220 = vsel %vm1071, %v841, 0
    %v1223 = vsel %vm1071, %v843, 0
    %v1226 = vsel %vm1071, %v845, 0
    %v1229 = vsel %vm1071, %v847, 0
    %v1232 = vsel %vm1071, %v849, 0
    %v1235 = vsel %vm1071, %v851, 0
    %v1238 = vsel %vm1071, %v853, 0
    %v1241 = vsel %vm1071, %v855, 0
    %v1244 = vsel %vm1071, %v857, 0
    %v1247 = vsel %vm1071, %v859, 0
    %v1250 = vsel %vm1071, %v861, 0
    %v1253 = vsel %vm1071, %v863, 0
    %v1256 = vsel %vm1071, %v865, 0
    %v1259 = vsel %vm1071, %v867, 0
    %v1262 = vsel %vm1071, %v869, 0
    %v1265 = vsel %vm1071, %v871, 0
    %v1268 = vsel %vm1071, %v873, 0
    %v1271 = vsel %vm1071, %v875, 0
    %v1274 = vsel %vm1071, %v877, 0
    %v1277 = vsel %vm1071, %v879, 0
    %v1280 = vsel %vm1071, %v881, 0
    %v1283 = vsel %vm1071, %v883, 0
    %v1286 = vsel %vm1071, %v885, 0
    %v1289 = vsel %vm1071, %v887, 0
    %v1292 = vsel %vm1071, %v889, 0
    %v1295 = vsel %vm1071, %v891, 0
    %v1298 = vsel %vm1071, %v893, 0
    %v1301 = vsel %vm1071, %v895, 0
    %v1304 = vsel %vm1071, %v897, 0
    %v1307 = vsel %vm1071, %v899, 0
    %v1310 = vsel %vm1071, %v901, 0
    %v1313 = vsel %vm1071, %v903, 0
    %v1316 = vsel %vm1071, %v905, 0
    %v1319 = vsel %vm1071, %v907, 0
    %v1322 = vsel %vm1071, %v909, 0
    %v1325 = vsel %vm1071, %v911, 0
    %v1328 = vsel %vm1071, %v913, 0
    %v1331 = vsel %vm1071, %v915, 0
    %v1334 = vsel %vm1071, %v917, 0
    %vm1336 = vcmask 1044480
    %v1338 = vsel %vm1336, %v1060, 0
    %1340 = vmatprep.subr.bf16.mxu0 0
    %1341 = vmatpush1.bf16.msra.mxu0 %v1057
    %1342 = vmatprep.subr.bf16.mxu0 0
    %1343 = vmatpush1.bf16.msra.mxu0 %v1056
    %1344 = vmatprep.subr.bf16.mxu0 0
    %1345 = vmatpush1.bf16.msra.mxu0 %v1055
    %1346 = vmatprep.subr.bf16.mxu0 0
    %1347 = vmatpush1.bf16.msra.mxu0 %v1054
    %1348 = vmatprep.subr.bf16.mxu0 0
    %1349 = vmatpush1.bf16.msra.mxu0 %v1053
    %1350 = vmatprep.subr.bf16.mxu0 0
    %1351 = vmatpush1.bf16.msra.mxu0 %v1052
    %1352 = vmatprep.subr.bf16.mxu0 0
    %1353 = vmatpush1.bf16.msra.mxu0 %v1051
    %1354 = vmatprep.subr.bf16.mxu0 0
    %1355 = vmatpush1.bf16.msra.mxu0 %v1050
    %1356 = vmatprep.subr.bf16.mxu0 0
    %1357 = vmatpush2.bf16.msra.mxu0 0
    %1358 = vmatprep.subr.bf16.mxu0 0
    %1359 = vmatpush2.bf16.msra.mxu0 0
    %1360 = vmatprep.subr.bf16.mxu0 0
    %1361 = vmatpush2.bf16.msra.mxu0 0
    %1362 = vmatprep.subr.bf16.mxu0 0
    %1363 = vmatpush2.bf16.msra.mxu0 0
    %1364 = vmatprep.subr.bf16.mxu0 0
    %1365 = vmatpush2.bf16.msra.mxu0 0
    %1366 = vmatprep.subr.bf16.mxu0 0
    %1367 = vmatpush2.bf16.msra.mxu0 %v1338
    %1368 = vmatprep.subr.bf16.mxu0 0
    %1369 = vmatpush2.bf16.msra.mxu0 %v1059
    %1370 = vmatprep.subr.bf16.mxu0 0
    %1371 = vmatpush2.bf16.msra.mxu0 %v1058
    %1372 = vmatprep.mubr.bf16.mxu0 %v1073
    %1373 = vmatmul.mubr.bf16.gmra.mxu0 %v742
    %v1374 = vpop.f32.mrf.mxu0
    %v1375 = vadd.f32 0.0, %v1374
    %v1376 = vpop.f32.mrf.mxu0
    %v1377 = vpop.f32.mrf.mxu0
    %v1378 = vadd.f32 0.0, %v1377
    %v1379 = vpop.f32.mrf.mxu0
    %1380 = vmatprep.mubr.bf16.mxu0 %v1076
    %1381 = vmatmul.mubr.bf16.gmra.mxu0 %v744
    %v1382 = vpop.f32.mrf.mxu0
    %v1383 = vadd.f32 0.0, %v1382
    %v1384 = vpop.f32.mrf.mxu0
    %v1385 = vpop.f32.mrf.mxu0
    %v1386 = vadd.f32 0.0, %v1385
    %v1387 = vpop.f32.mrf.mxu0
    %1388 = vmatprep.mubr.bf16.mxu0 %v1079
    %1389 = vmatmul.mubr.bf16.gmra.mxu0 %v746
    %v1390 = vpop.f32.mrf.mxu0
    %v1391 = vadd.f32 0.0, %v1390
    %v1392 = vpop.f32.mrf.mxu0
    %v1393 = vpop.f32.mrf.mxu0
    %v1394 = vadd.f32 0.0, %v1393
    %v1395 = vpop.f32.mrf.mxu0
    %1396 = vmatprep.mubr.bf16.mxu0 %v1082
    %1397 = vmatmul.mubr.bf16.gmra.mxu0 %v748
    %v1398 = vpop.f32.mrf.mxu0
    %v1399 = vadd.f32 0.0, %v1398
    %v1400 = vpop.f32.mrf.mxu0
    %v1401 = vpop.f32.mrf.mxu0
    %v1402 = vadd.f32 0.0, %v1401
    %v1403 = vpop.f32.mrf.mxu0
    %1404 = vmatprep.mubr.bf16.mxu0 %v1085
    %1405 = vmatmul.mubr.bf16.gmra.mxu0 %v750
    %v1406 = vpop.f32.mrf.mxu0
    %v1407 = vadd.f32 0.0, %v1406
    %v1408 = vpop.f32.mrf.mxu0
    %v1409 = vpop.f32.mrf.mxu0
    %v1410 = vadd.f32 0.0, %v1409
    %v1411 = vpop.f32.mrf.mxu0
    %1412 = vmatprep.mubr.bf16.mxu0 %v1088
    %1413 = vmatmul.mubr.bf16.gmra.mxu0 %v752
    %v1414 = vpop.f32.mrf.mxu0
    %v1415 = vadd.f32 0.0, %v1414
    %v1416 = vpop.f32.mrf.mxu0
    %v1417 = vpop.f32.mrf.mxu0
    %v1418 = vadd.f32 0.0, %v1417
    %v1419 = vpop.f32.mrf.mxu0
    %1420 = vmatprep.mubr.bf16.mxu0 %v1091
    %1421 = vmatmul.mubr.bf16.gmra.mxu0 %v754
    %v1422 = vpop.f32.mrf.mxu0
    %v1423 = vadd.f32 0.0, %v1422
    %v1424 = vpop.f32.mrf.mxu0
    %v1425 = vpop.f32.mrf.mxu0
    %v1426 = vadd.f32 0.0, %v1425
    %v1427 = vpop.f32.mrf.mxu0
    %1428 = vmatprep.mubr.bf16.mxu0 %v1094
    %1429 = vmatmul.mubr.bf16.gmra.mxu0 %v756
    %v1430 = vpop.f32.mrf.mxu0
    %v1431 = vadd.f32 0.0, %v1430
    %v1432 = vpop.f32.mrf.mxu0
    %v1433 = vpop.f32.mrf.mxu0
    %v1434 = vadd.f32 0.0, %v1433
    %v1435 = vpop.f32.mrf.mxu0
    %1436 = vmatprep.mubr.bf16.mxu0 %v1097
    %1437 = vmatmul.mubr.bf16.gmra.mxu0 %v758
    %v1438 = vpop.f32.mrf.mxu0
    %v1439 = vadd.f32 0.0, %v1438
    %v1440 = vpop.f32.mrf.mxu0
    %v1441 = vpop.f32.mrf.mxu0
    %v1442 = vadd.f32 0.0, %v1441
    %v1443 = vpop.f32.mrf.mxu0
    %1444 = vmatprep.mubr.bf16.mxu0 %v1100
    %1445 = vmatmul.mubr.bf16.gmra.mxu0 %v760
    %v1446 = vpop.f32.mrf.mxu0
    %v1447 = vadd.f32 0.0, %v1446
    %v1448 = vpop.f32.mrf.mxu0
    %v1449 = vpop.f32.mrf.mxu0
    %v1450 = vadd.f32 0.0, %v1449
    %v1451 = vpop.f32.mrf.mxu0
    %1452 = vmatprep.mubr.bf16.mxu0 %v1103
    %1453 = vmatmul.mubr.bf16.gmra.mxu0 %v762
    %v1454 = vpop.f32.mrf.mxu0
    %v1455 = vadd.f32 0.0, %v1454
    %v1456 = vpop.f32.mrf.mxu0
    %v1457 = vpop.f32.mrf.mxu0
    %v1458 = vadd.f32 0.0, %v1457
    %v1459 = vpop.f32.mrf.mxu0
    %1460 = vmatprep.mubr.bf16.mxu0 %v1106
    %1461 = vmatmul.mubr.bf16.gmra.mxu0 %v764
    %v1462 = vpop.f32.mrf.mxu0
    %v1463 = vadd.f32 0.0, %v1462
    %v1464 = vpop.f32.mrf.mxu0
    %v1465 = vpop.f32.mrf.mxu0
    %v1466 = vadd.f32 0.0, %v1465
    %v1467 = vpop.f32.mrf.mxu0
    %1468 = vmatprep.mubr.bf16.mxu0 %v1109
    %1469 = vmatmul.mubr.bf16.gmra.mxu0 %v766
    %v1470 = vpop.f32.mrf.mxu0
    %v1471 = vadd.f32 0.0, %v1470
    %v1472 = vpop.f32.mrf.mxu0
    %v1473 = vpop.f32.mrf.mxu0
    %v1474 = vadd.f32 0.0, %v1473
    %v1475 = vpop.f32.mrf.mxu0
    %1476 = vmatprep.mubr.bf16.mxu0 %v1112
    %1477 = vmatmul.mubr.bf16.gmra.mxu0 %v768
    %v1478 = vpop.f32.mrf.mxu0
    %v1479 = vadd.f32 0.0, %v1478
    %v1480 = vpop.f32.mrf.mxu0
    %v1481 = vpop.f32.mrf.mxu0
    %v1482 = vadd.f32 0.0, %v1481
    %v1483 = vpop.f32.mrf.mxu0
    %1484 = vmatprep.mubr.bf16.mxu0 %v1115
    %1485 = vmatmul.mubr.bf16.gmra.mxu0 %v770
    %v1486 = vpop.f32.mrf.mxu0
    %v1487 = vadd.f32 0.0, %v1486
    %v1488 = vpop.f32.mrf.mxu0
    %v1489 = vpop.f32.mrf.mxu0
    %v1490 = vadd.f32 0.0, %v1489
    %v1491 = vpop.f32.mrf.mxu0
    %1492 = vmatprep.mubr.bf16.mxu0 %v1118
    %1493 = vmatmul.mubr.bf16.gmra.mxu0 %v772
    %v1494 = vpop.f32.mrf.mxu0
    %v1495 = vadd.f32 0.0, %v1494
    %v1496 = vpop.f32.mrf.mxu0
    %v1497 = vpop.f32.mrf.mxu0
    %v1498 = vadd.f32 0.0, %v1497
    %v1499 = vpop.f32.mrf.mxu0
    %1500 = vmatprep.mubr.bf16.mxu0 %v1121
    %1501 = vmatmul.mubr.bf16.gmra.mxu0 %v774
    %v1502 = vpop.f32.mrf.mxu0
    %v1503 = vadd.f32 0.0, %v1502
    %v1504 = vpop.f32.mrf.mxu0
    %v1505 = vpop.f32.mrf.mxu0
    %v1506 = vadd.f32 0.0, %v1505
    %v1507 = vpop.f32.mrf.mxu0
    %1508 = vmatprep.mubr.bf16.mxu0 %v1124
    %1509 = vmatmul.mubr.bf16.gmra.mxu0 %v776
    %v1510 = vpop.f32.mrf.mxu0
    %v1511 = vadd.f32 0.0, %v1510
    %v1512 = vpop.f32.mrf.mxu0
    %v1513 = vpop.f32.mrf.mxu0
    %v1514 = vadd.f32 0.0, %v1513
    %v1515 = vpop.f32.mrf.mxu0
    %1516 = vmatprep.mubr.bf16.mxu0 %v1127
    %1517 = vmatmul.mubr.bf16.gmra.mxu0 %v778
    %v1518 = vpop.f32.mrf.mxu0
    %v1519 = vadd.f32 0.0, %v1518
    %v1520 = vpop.f32.mrf.mxu0
    %v1521 = vpop.f32.mrf.mxu0
    %v1522 = vadd.f32 0.0, %v1521
    %v1523 = vpop.f32.mrf.mxu0
    %1524 = vmatprep.mubr.bf16.mxu0 %v1130
    %1525 = vmatmul.mubr.bf16.gmra.mxu0 %v780
    %v1526 = vpop.f32.mrf.mxu0
    %v1527 = vadd.f32 0.0, %v1526
    %v1528 = vpop.f32.mrf.mxu0
    %v1529 = vpop.f32.mrf.mxu0
    %v1530 = vadd.f32 0.0, %v1529
    %v1531 = vpop.f32.mrf.mxu0
    %1532 = vmatprep.mubr.bf16.mxu0 %v1133
    %1533 = vmatmul.mubr.bf16.gmra.mxu0 %v782
    %v1534 = vpop.f32.mrf.mxu0
    %v1535 = vadd.f32 0.0, %v1534
    %v1536 = vpop.f32.mrf.mxu0
    %v1537 = vpop.f32.mrf.mxu0
    %v1538 = vadd.f32 0.0, %v1537
    %v1539 = vpop.f32.mrf.mxu0
    %1540 = vmatprep.mubr.bf16.mxu0 %v1136
    %1541 = vmatmul.mubr.bf16.gmra.mxu0 %v784
    %v1542 = vpop.f32.mrf.mxu0
    %v1543 = vadd.f32 0.0, %v1542
    %v1544 = vpop.f32.mrf.mxu0
    %v1545 = vpop.f32.mrf.mxu0
    %v1546 = vadd.f32 0.0, %v1545
    %v1547 = vpop.f32.mrf.mxu0
    %1548 = vmatprep.mubr.bf16.mxu0 %v1139
    %1549 = vmatmul.mubr.bf16.gmra.mxu0 %v786
    %v1550 = vpop.f32.mrf.mxu0
    %v1551 = vadd.f32 0.0, %v1550
    %v1552 = vpop.f32.mrf.mxu0
    %v1553 = vpop.f32.mrf.mxu0
    %v1554 = vadd.f32 0.0, %v1553
    %v1555 = vpop.f32.mrf.mxu0
    %1556 = vmatprep.mubr.bf16.mxu0 %v1142
    %1557 = vmatmul.mubr.bf16.gmra.mxu0 %v788
    %v1558 = vpop.f32.mrf.mxu0
    %v1559 = vadd.f32 0.0, %v1558
    %v1560 = vpop.f32.mrf.mxu0
    %v1561 = vpop.f32.mrf.mxu0
    %v1562 = vadd.f32 0.0, %v1561
    %v1563 = vpop.f32.mrf.mxu0
    %1564 = vmatprep.mubr.bf16.mxu0 %v1145
    %1565 = vmatmul.mubr.bf16.gmra.mxu0 %v790
    %v1566 = vpop.f32.mrf.mxu0
    %v1567 = vadd.f32 0.0, %v1566
    %v1568 = vpop.f32.mrf.mxu0
    %v1569 = vpop.f32.mrf.mxu0
    %v1570 = vadd.f32 0.0, %v1569
    %v1571 = vpop.f32.mrf.mxu0
    %1572 = vmatprep.mubr.bf16.mxu0 %v1148
    %1573 = vmatmul.mubr.bf16.gmra.mxu0 %v792
    %v1574 = vpop.f32.mrf.mxu0
    %v1575 = vadd.f32 0.0, %v1574
    %v1576 = vpop.f32.mrf.mxu0
    %v1577 = vpop.f32.mrf.mxu0
    %v1578 = vadd.f32 0.0, %v1577
    %v1579 = vpop.f32.mrf.mxu0
    %1580 = vmatprep.mubr.bf16.mxu0 %v1151
    %1581 = vmatmul.mubr.bf16.gmra.mxu0 %v794
    %v1582 = vpop.f32.mrf.mxu0
    %v1583 = vadd.f32 0.0, %v1582
    %v1584 = vpop.f32.mrf.mxu0
    %v1585 = vpop.f32.mrf.mxu0
    %v1586 = vadd.f32 0.0, %v1585
    %v1587 = vpop.f32.mrf.mxu0
    %1588 = vmatprep.mubr.bf16.mxu0 %v1154
    %1589 = vmatmul.mubr.bf16.gmra.mxu0 %v796
    %v1590 = vpop.f32.mrf.mxu0
    %v1591 = vadd.f32 0.0, %v1590
    %v1592 = vpop.f32.mrf.mxu0
    %v1593 = vpop.f32.mrf.mxu0
    %v1594 = vadd.f32 0.0, %v1593
    %v1595 = vpop.f32.mrf.mxu0
    %1596 = vmatprep.mubr.bf16.mxu0 %v1157
    %1597 = vmatmul.mubr.bf16.gmra.mxu0 %v798
    %v1598 = vpop.f32.mrf.mxu0
    %v1599 = vadd.f32 0.0, %v1598
    %v1600 = vpop.f32.mrf.mxu0
    %v1601 = vpop.f32.mrf.mxu0
    %v1602 = vadd.f32 0.0, %v1601
    %v1603 = vpop.f32.mrf.mxu0
    %1604 = vmatprep.mubr.bf16.mxu0 %v1160
    %1605 = vmatmul.mubr.bf16.gmra.mxu0 %v800
    %v1606 = vpop.f32.mrf.mxu0
    %v1607 = vadd.f32 0.0, %v1606
    %v1608 = vpop.f32.mrf.mxu0
    %v1609 = vpop.f32.mrf.mxu0
    %v1610 = vadd.f32 0.0, %v1609
    %v1611 = vpop.f32.mrf.mxu0
    %1612 = vmatprep.mubr.bf16.mxu0 %v1163
    %1613 = vmatmul.mubr.bf16.gmra.mxu0 %v802
    %v1614 = vpop.f32.mrf.mxu0
    %v1615 = vadd.f32 0.0, %v1614
    %v1616 = vpop.f32.mrf.mxu0
    %v1617 = vpop.f32.mrf.mxu0
    %v1618 = vadd.f32 0.0, %v1617
    %v1619 = vpop.f32.mrf.mxu0
    %1620 = vmatprep.mubr.bf16.mxu0 %v1166
    %1621 = vmatmul.mubr.bf16.gmra.mxu0 %v804
    %v1622 = vpop.f32.mrf.mxu0
    %v1623 = vadd.f32 0.0, %v1622
    %v1624 = vpop.f32.mrf.mxu0
    %v1625 = vpop.f32.mrf.mxu0
    %v1626 = vadd.f32 0.0, %v1625
    %v1627 = vpop.f32.mrf.mxu0
    %1628 = vmatprep.mubr.bf16.mxu0 %v1169
    %1629 = vmatmul.mubr.bf16.gmra.mxu0 %v806
    %v1630 = vpop.f32.mrf.mxu0
    %v1631 = vadd.f32 0.0, %v1630
    %v1632 = vpop.f32.mrf.mxu0
    %v1633 = vpop.f32.mrf.mxu0
    %v1634 = vadd.f32 0.0, %v1633
    %v1635 = vpop.f32.mrf.mxu0
    %1636 = vmatprep.mubr.bf16.mxu0 %v1172
    %1637 = vmatmul.mubr.bf16.gmra.mxu0 %v808
    %v1638 = vpop.f32.mrf.mxu0
    %v1639 = vadd.f32 0.0, %v1638
    %v1640 = vpop.f32.mrf.mxu0
    %v1641 = vpop.f32.mrf.mxu0
    %v1642 = vadd.f32 0.0, %v1641
    %v1643 = vpop.f32.mrf.mxu0
    %1644 = vmatprep.mubr.bf16.mxu0 %v1175
    %1645 = vmatmul.mubr.bf16.gmra.mxu0 %v810
    %v1646 = vpop.f32.mrf.mxu0
    %v1647 = vadd.f32 0.0, %v1646
    %v1648 = vpop.f32.mrf.mxu0
    %v1649 = vpop.f32.mrf.mxu0
    %v1650 = vadd.f32 0.0, %v1649
    %v1651 = vpop.f32.mrf.mxu0
    %1652 = vmatprep.mubr.bf16.mxu0 %v1178
    %1653 = vmatmul.mubr.bf16.gmra.mxu0 %v812
    %v1654 = vpop.f32.mrf.mxu0
    %v1655 = vadd.f32 0.0, %v1654
    %v1656 = vpop.f32.mrf.mxu0
    %v1657 = vpop.f32.mrf.mxu0
    %v1658 = vadd.f32 0.0, %v1657
    %v1659 = vpop.f32.mrf.mxu0
    %1660 = vmatprep.mubr.bf16.mxu0 %v1181
    %1661 = vmatmul.mubr.bf16.gmra.mxu0 %v814
    %v1662 = vpop.f32.mrf.mxu0
    %v1663 = vadd.f32 0.0, %v1662
    %v1664 = vpop.f32.mrf.mxu0
    %v1665 = vpop.f32.mrf.mxu0
    %v1666 = vadd.f32 0.0, %v1665
    %v1667 = vpop.f32.mrf.mxu0
    %1668 = vmatprep.mubr.bf16.mxu0 %v1184
    %1669 = vmatmul.mubr.bf16.gmra.mxu0 %v816
    %v1670 = vpop.f32.mrf.mxu0
    %v1671 = vadd.f32 0.0, %v1670
    %v1672 = vpop.f32.mrf.mxu0
    %v1673 = vpop.f32.mrf.mxu0
    %v1674 = vadd.f32 0.0, %v1673
    %v1675 = vpop.f32.mrf.mxu0
    %1676 = vmatprep.mubr.bf16.mxu0 %v1187
    %1677 = vmatmul.mubr.bf16.gmra.mxu0 %v818
    %v1678 = vpop.f32.mrf.mxu0
    %v1679 = vadd.f32 0.0, %v1678
    %v1680 = vpop.f32.mrf.mxu0
    %v1681 = vpop.f32.mrf.mxu0
    %v1682 = vadd.f32 0.0, %v1681
    %v1683 = vpop.f32.mrf.mxu0
    %1684 = vmatprep.mubr.bf16.mxu0 %v1190
    %1685 = vmatmul.mubr.bf16.gmra.mxu0 %v820
    %v1686 = vpop.f32.mrf.mxu0
    %v1687 = vadd.f32 0.0, %v1686
    %v1688 = vpop.f32.mrf.mxu0
    %v1689 = vpop.f32.mrf.mxu0
    %v1690 = vadd.f32 0.0, %v1689
    %v1691 = vpop.f32.mrf.mxu0
    %1692 = vmatprep.mubr.bf16.mxu0 %v1193
    %1693 = vmatmul.mubr.bf16.gmra.mxu0 %v822
    %v1694 = vpop.f32.mrf.mxu0
    %v1695 = vadd.f32 0.0, %v1694
    %v1696 = vpop.f32.mrf.mxu0
    %v1697 = vpop.f32.mrf.mxu0
    %v1698 = vadd.f32 0.0, %v1697
    %v1699 = vpop.f32.mrf.mxu0
    %1700 = vmatprep.mubr.bf16.mxu0 %v1196
    %1701 = vmatmul.mubr.bf16.gmra.mxu0 %v824
    %v1702 = vpop.f32.mrf.mxu0
    %v1703 = vadd.f32 0.0, %v1702
    %v1704 = vpop.f32.mrf.mxu0
    %v1705 = vpop.f32.mrf.mxu0
    %v1706 = vadd.f32 0.0, %v1705
    %v1707 = vpop.f32.mrf.mxu0
    %1708 = vmatprep.mubr.bf16.mxu0 %v1199
    %1709 = vmatmul.mubr.bf16.gmra.mxu0 %v826
    %v1710 = vpop.f32.mrf.mxu0
    %v1711 = vadd.f32 0.0, %v1710
    %v1712 = vpop.f32.mrf.mxu0
    %v1713 = vpop.f32.mrf.mxu0
    %v1714 = vadd.f32 0.0, %v1713
    %v1715 = vpop.f32.mrf.mxu0
    %1716 = vmatprep.mubr.bf16.mxu0 %v1202
    %1717 = vmatmul.mubr.bf16.gmra.mxu0 %v828
    %v1718 = vpop.f32.mrf.mxu0
    %v1719 = vadd.f32 0.0, %v1718
    %v1720 = vpop.f32.mrf.mxu0
    %v1721 = vpop.f32.mrf.mxu0
    %v1722 = vadd.f32 0.0, %v1721
    %v1723 = vpop.f32.mrf.mxu0
    %1724 = vmatprep.mubr.bf16.mxu0 %v1205
    %1725 = vmatmul.mubr.bf16.gmra.mxu0 %v830
    %v1726 = vpop.f32.mrf.mxu0
    %v1727 = vadd.f32 0.0, %v1726
    %v1728 = vpop.f32.mrf.mxu0
    %v1729 = vpop.f32.mrf.mxu0
    %v1730 = vadd.f32 0.0, %v1729
    %v1731 = vpop.f32.mrf.mxu0
    %1732 = vmatprep.mubr.bf16.mxu0 %v1208
    %1733 = vmatmul.mubr.bf16.gmra.mxu0 %v832
    %v1734 = vpop.f32.mrf.mxu0
    %v1735 = vadd.f32 0.0, %v1734
    %v1736 = vpop.f32.mrf.mxu0
    %v1737 = vpop.f32.mrf.mxu0
    %v1738 = vadd.f32 0.0, %v1737
    %v1739 = vpop.f32.mrf.mxu0
    %1740 = vmatprep.mubr.bf16.mxu0 %v1211
    %1741 = vmatmul.mubr.bf16.gmra.mxu0 %v834
    %v1742 = vpop.f32.mrf.mxu0
    %v1743 = vadd.f32 0.0, %v1742
    %v1744 = vpop.f32.mrf.mxu0
    %v1745 = vpop.f32.mrf.mxu0
    %v1746 = vadd.f32 0.0, %v1745
    %v1747 = vpop.f32.mrf.mxu0
    %1748 = vmatprep.mubr.bf16.mxu0 %v1214
    %1749 = vmatmul.mubr.bf16.gmra.mxu0 %v836
    %v1750 = vpop.f32.mrf.mxu0
    %v1751 = vadd.f32 0.0, %v1750
    %v1752 = vpop.f32.mrf.mxu0
    %v1753 = vpop.f32.mrf.mxu0
    %v1754 = vadd.f32 0.0, %v1753
    %v1755 = vpop.f32.mrf.mxu0
    %1756 = vmatprep.mubr.bf16.mxu0 %v1217
    %1757 = vmatmul.mubr.bf16.gmra.mxu0 %v838
    %v1758 = vpop.f32.mrf.mxu0
    %v1759 = vadd.f32 0.0, %v1758
    %v1760 = vpop.f32.mrf.mxu0
    %v1761 = vpop.f32.mrf.mxu0
    %v1762 = vadd.f32 0.0, %v1761
    %v1763 = vpop.f32.mrf.mxu0
    %1764 = vmatprep.mubr.bf16.mxu0 %v1220
    %1765 = vmatmul.mubr.bf16.gmra.mxu0 %v840
    %v1766 = vpop.f32.mrf.mxu0
    %v1767 = vadd.f32 0.0, %v1766
    %v1768 = vpop.f32.mrf.mxu0
    %v1769 = vpop.f32.mrf.mxu0
    %v1770 = vadd.f32 0.0, %v1769
    %v1771 = vpop.f32.mrf.mxu0
    %1772 = vmatprep.mubr.bf16.mxu0 %v1223
    %1773 = vmatmul.mubr.bf16.gmra.mxu0 %v842
    %v1774 = vpop.f32.mrf.mxu0
    %v1775 = vadd.f32 0.0, %v1774
    %v1776 = vpop.f32.mrf.mxu0
    %v1777 = vpop.f32.mrf.mxu0
    %v1778 = vadd.f32 0.0, %v1777
    %v1779 = vpop.f32.mrf.mxu0
    %1780 = vmatprep.mubr.bf16.mxu0 %v1226
    %1781 = vmatmul.mubr.bf16.gmra.mxu0 %v844
    %v1782 = vpop.f32.mrf.mxu0
    %v1783 = vadd.f32 0.0, %v1782
    %v1784 = vpop.f32.mrf.mxu0
    %v1785 = vpop.f32.mrf.mxu0
    %v1786 = vadd.f32 0.0, %v1785
    %v1787 = vpop.f32.mrf.mxu0
    %1788 = vmatprep.mubr.bf16.mxu0 %v1229
    %1789 = vmatmul.mubr.bf16.gmra.mxu0 %v846
    %v1790 = vpop.f32.mrf.mxu0
    %v1791 = vadd.f32 0.0, %v1790
    %v1792 = vpop.f32.mrf.mxu0
    %v1793 = vpop.f32.mrf.mxu0
    %v1794 = vadd.f32 0.0, %v1793
    %v1795 = vpop.f32.mrf.mxu0
    %1796 = vmatprep.mubr.bf16.mxu0 %v1232
    %1797 = vmatmul.mubr.bf16.gmra.mxu0 %v848
    %v1798 = vpop.f32.mrf.mxu0
    %v1799 = vadd.f32 0.0, %v1798
    %v1800 = vpop.f32.mrf.mxu0
    %v1801 = vpop.f32.mrf.mxu0
    %v1802 = vadd.f32 0.0, %v1801
    %v1803 = vpop.f32.mrf.mxu0
    %1804 = vmatprep.mubr.bf16.mxu0 %v1235
    %1805 = vmatmul.mubr.bf16.gmra.mxu0 %v850
    %v1806 = vpop.f32.mrf.mxu0
    %v1807 = vadd.f32 0.0, %v1806
    %v1808 = vpop.f32.mrf.mxu0
    %v1809 = vpop.f32.mrf.mxu0
    %v1810 = vadd.f32 0.0, %v1809
    %v1811 = vpop.f32.mrf.mxu0
    %1812 = vmatprep.mubr.bf16.mxu0 %v1238
    %1813 = vmatmul.mubr.bf16.gmra.mxu0 %v852
    %v1814 = vpop.f32.mrf.mxu0
    %v1815 = vadd.f32 0.0, %v1814
    %v1816 = vpop.f32.mrf.mxu0
    %v1817 = vpop.f32.mrf.mxu0
    %v1818 = vadd.f32 0.0, %v1817
    %v1819 = vpop.f32.mrf.mxu0
    %1820 = vmatprep.mubr.bf16.mxu0 %v1241
    %1821 = vmatmul.mubr.bf16.gmra.mxu0 %v854
    %v1822 = vpop.f32.mrf.mxu0
    %v1823 = vadd.f32 0.0, %v1822
    %v1824 = vpop.f32.mrf.mxu0
    %v1825 = vpop.f32.mrf.mxu0
    %v1826 = vadd.f32 0.0, %v1825
    %v1827 = vpop.f32.mrf.mxu0
    %1828 = vmatprep.mubr.bf16.mxu0 %v1244
    %1829 = vmatmul.mubr.bf16.gmra.mxu0 %v856
    %v1830 = vpop.f32.mrf.mxu0
    %v1831 = vadd.f32 0.0, %v1830
    %v1832 = vpop.f32.mrf.mxu0
    %v1833 = vpop.f32.mrf.mxu0
    %v1834 = vadd.f32 0.0, %v1833
    %v1835 = vpop.f32.mrf.mxu0
    %1836 = vmatprep.mubr.bf16.mxu0 %v1247
    %1837 = vmatmul.mubr.bf16.gmra.mxu0 %v858
    %v1838 = vpop.f32.mrf.mxu0
    %v1839 = vadd.f32 0.0, %v1838
    %v1840 = vpop.f32.mrf.mxu0
    %v1841 = vpop.f32.mrf.mxu0
    %v1842 = vadd.f32 0.0, %v1841
    %v1843 = vpop.f32.mrf.mxu0
    %1844 = vmatprep.mubr.bf16.mxu0 %v1250
    %1845 = vmatmul.mubr.bf16.gmra.mxu0 %v860
    %v1846 = vpop.f32.mrf.mxu0
    %v1847 = vadd.f32 0.0, %v1846
    %v1848 = vpop.f32.mrf.mxu0
    %v1849 = vpop.f32.mrf.mxu0
    %v1850 = vadd.f32 0.0, %v1849
    %v1851 = vpop.f32.mrf.mxu0
    %1852 = vmatprep.mubr.bf16.mxu0 %v1253
    %1853 = vmatmul.mubr.bf16.gmra.mxu0 %v862
    %v1854 = vpop.f32.mrf.mxu0
    %v1855 = vadd.f32 0.0, %v1854
    %v1856 = vpop.f32.mrf.mxu0
    %v1857 = vpop.f32.mrf.mxu0
    %v1858 = vadd.f32 0.0, %v1857
    %v1859 = vpop.f32.mrf.mxu0
    %1860 = vmatprep.mubr.bf16.mxu0 %v1256
    %1861 = vmatmul.mubr.bf16.gmra.mxu0 %v864
    %v1862 = vpop.f32.mrf.mxu0
    %v1863 = vadd.f32 0.0, %v1862
    %v1864 = vpop.f32.mrf.mxu0
    %v1865 = vpop.f32.mrf.mxu0
    %v1866 = vadd.f32 0.0, %v1865
    %v1867 = vpop.f32.mrf.mxu0
    %1868 = vmatprep.mubr.bf16.mxu0 %v1259
    %1869 = vmatmul.mubr.bf16.gmra.mxu0 %v866
    %v1870 = vpop.f32.mrf.mxu0
    %v1871 = vadd.f32 0.0, %v1870
    %v1872 = vpop.f32.mrf.mxu0
    %v1873 = vpop.f32.mrf.mxu0
    %v1874 = vadd.f32 0.0, %v1873
    %v1875 = vpop.f32.mrf.mxu0
    %1876 = vmatprep.mubr.bf16.mxu0 %v1262
    %1877 = vmatmul.mubr.bf16.gmra.mxu0 %v868
    %v1878 = vpop.f32.mrf.mxu0
    %v1879 = vadd.f32 0.0, %v1878
    %v1880 = vpop.f32.mrf.mxu0
    %v1881 = vpop.f32.mrf.mxu0
    %v1882 = vadd.f32 0.0, %v1881
    %v1883 = vpop.f32.mrf.mxu0
    %1884 = vmatprep.mubr.bf16.mxu0 %v1265
    %1885 = vmatmul.mubr.bf16.gmra.mxu0 %v870
    %v1886 = vpop.f32.mrf.mxu0
    %v1887 = vadd.f32 0.0, %v1886
    %v1888 = vpop.f32.mrf.mxu0
    %v1889 = vpop.f32.mrf.mxu0
    %v1890 = vadd.f32 0.0, %v1889
    %v1891 = vpop.f32.mrf.mxu0
    %1892 = vmatprep.mubr.bf16.mxu0 %v1268
    %1893 = vmatmul.mubr.bf16.gmra.mxu0 %v872
    %v1894 = vpop.f32.mrf.mxu0
    %v1895 = vadd.f32 0.0, %v1894
    %v1896 = vpop.f32.mrf.mxu0
    %v1897 = vpop.f32.mrf.mxu0
    %v1898 = vadd.f32 0.0, %v1897
    %v1899 = vpop.f32.mrf.mxu0
    %1900 = vmatprep.mubr.bf16.mxu0 %v1271
    %1901 = vmatmul.mubr.bf16.gmra.mxu0 %v874
    %v1902 = vpop.f32.mrf.mxu0
    %v1903 = vadd.f32 0.0, %v1902
    %v1904 = vpop.f32.mrf.mxu0
    %v1905 = vpop.f32.mrf.mxu0
    %v1906 = vadd.f32 0.0, %v1905
    %v1907 = vpop.f32.mrf.mxu0
    %1908 = vmatprep.mubr.bf16.mxu0 %v1274
    %1909 = vmatmul.mubr.bf16.gmra.mxu0 %v876
    %v1910 = vpop.f32.mrf.mxu0
    %v1911 = vadd.f32 0.0, %v1910
    %v1912 = vpop.f32.mrf.mxu0
    %v1913 = vpop.f32.mrf.mxu0
    %v1914 = vadd.f32 0.0, %v1913
    %v1915 = vpop.f32.mrf.mxu0
    %1916 = vmatprep.mubr.bf16.mxu0 %v1277
    %1917 = vmatmul.mubr.bf16.gmra.mxu0 %v878
    %v1918 = vpop.f32.mrf.mxu0
    %v1919 = vadd.f32 0.0, %v1918
    %v1920 = vpop.f32.mrf.mxu0
    %v1921 = vpop.f32.mrf.mxu0
    %v1922 = vadd.f32 0.0, %v1921
    %v1923 = vpop.f32.mrf.mxu0
    %1924 = vmatprep.mubr.bf16.mxu0 %v1280
    %1925 = vmatmul.mubr.bf16.gmra.mxu0 %v880
    %v1926 = vpop.f32.mrf.mxu0
    %v1927 = vadd.f32 0.0, %v1926
    %v1928 = vpop.f32.mrf.mxu0
    %v1929 = vpop.f32.mrf.mxu0
    %v1930 = vadd.f32 0.0, %v1929
    %v1931 = vpop.f32.mrf.mxu0
    %1932 = vmatprep.mubr.bf16.mxu0 %v1283
    %1933 = vmatmul.mubr.bf16.gmra.mxu0 %v882
    %v1934 = vpop.f32.mrf.mxu0
    %v1935 = vadd.f32 0.0, %v1934
    %v1936 = vpop.f32.mrf.mxu0
    %v1937 = vpop.f32.mrf.mxu0
    %v1938 = vadd.f32 0.0, %v1937
    %v1939 = vpop.f32.mrf.mxu0
    %1940 = vmatprep.mubr.bf16.mxu0 %v1286
    %1941 = vmatmul.mubr.bf16.gmra.mxu0 %v884
    %v1942 = vpop.f32.mrf.mxu0
    %v1943 = vadd.f32 0.0, %v1942
    %v1944 = vpop.f32.mrf.mxu0
    %v1945 = vpop.f32.mrf.mxu0
    %v1946 = vadd.f32 0.0, %v1945
    %v1947 = vpop.f32.mrf.mxu0
    %1948 = vmatprep.mubr.bf16.mxu0 %v1289
    %1949 = vmatmul.mubr.bf16.gmra.mxu0 %v886
    %v1950 = vpop.f32.mrf.mxu0
    %v1951 = vadd.f32 0.0, %v1950
    %v1952 = vpop.f32.mrf.mxu0
    %v1953 = vpop.f32.mrf.mxu0
    %v1954 = vadd.f32 0.0, %v1953
    %v1955 = vpop.f32.mrf.mxu0
    %1956 = vmatprep.mubr.bf16.mxu0 %v1292
    %1957 = vmatmul.mubr.bf16.gmra.mxu0 %v888
    %v1958 = vpop.f32.mrf.mxu0
    %v1959 = vadd.f32 0.0, %v1958
    %v1960 = vpop.f32.mrf.mxu0
    %v1961 = vpop.f32.mrf.mxu0
    %v1962 = vadd.f32 0.0, %v1961
    %v1963 = vpop.f32.mrf.mxu0
    %1964 = vmatprep.mubr.bf16.mxu0 %v1295
    %1965 = vmatmul.mubr.bf16.gmra.mxu0 %v890
    %v1966 = vpop.f32.mrf.mxu0
    %v1967 = vadd.f32 0.0, %v1966
    %v1968 = vpop.f32.mrf.mxu0
    %v1969 = vpop.f32.mrf.mxu0
    %v1970 = vadd.f32 0.0, %v1969
    %v1971 = vpop.f32.mrf.mxu0
    %1972 = vmatprep.mubr.bf16.mxu0 %v1298
    %1973 = vmatmul.mubr.bf16.gmra.mxu0 %v892
    %v1974 = vpop.f32.mrf.mxu0
    %v1975 = vadd.f32 0.0, %v1974
    %v1976 = vpop.f32.mrf.mxu0
    %v1977 = vpop.f32.mrf.mxu0
    %v1978 = vadd.f32 0.0, %v1977
    %v1979 = vpop.f32.mrf.mxu0
    %1980 = vmatprep.mubr.bf16.mxu0 %v1301
    %1981 = vmatmul.mubr.bf16.gmra.mxu0 %v894
    %v1982 = vpop.f32.mrf.mxu0
    %v1983 = vadd.f32 0.0, %v1982
    %v1984 = vpop.f32.mrf.mxu0
    %v1985 = vpop.f32.mrf.mxu0
    %v1986 = vadd.f32 0.0, %v1985
    %v1987 = vpop.f32.mrf.mxu0
    %1988 = vmatprep.mubr.bf16.mxu0 %v1304
    %1989 = vmatmul.mubr.bf16.gmra.mxu0 %v896
    %v1990 = vpop.f32.mrf.mxu0
    %v1991 = vadd.f32 0.0, %v1990
    %v1992 = vpop.f32.mrf.mxu0
    %v1993 = vpop.f32.mrf.mxu0
    %v1994 = vadd.f32 0.0, %v1993
    %v1995 = vpop.f32.mrf.mxu0
    %1996 = vmatprep.mubr.bf16.mxu0 %v1307
    %1997 = vmatmul.mubr.bf16.gmra.mxu0 %v898
    %v1998 = vpop.f32.mrf.mxu0
    %v1999 = vadd.f32 0.0, %v1998
    %v2000 = vpop.f32.mrf.mxu0
    %v2001 = vpop.f32.mrf.mxu0
    %v2002 = vadd.f32 0.0, %v2001
    %v2003 = vpop.f32.mrf.mxu0
    %2004 = vmatprep.mubr.bf16.mxu0 %v1310
    %2005 = vmatmul.mubr.bf16.gmra.mxu0 %v900
    %v2006 = vpop.f32.mrf.mxu0
    %v2007 = vadd.f32 0.0, %v2006
    %v2008 = vpop.f32.mrf.mxu0
    %v2009 = vpop.f32.mrf.mxu0
    %v2010 = vadd.f32 0.0, %v2009
    %v2011 = vpop.f32.mrf.mxu0
    %2012 = vmatprep.mubr.bf16.mxu0 %v1313
    %2013 = vmatmul.mubr.bf16.gmra.mxu0 %v902
    %v2014 = vpop.f32.mrf.mxu0
    %v2015 = vadd.f32 0.0, %v2014
    %v2016 = vpop.f32.mrf.mxu0
    %v2017 = vpop.f32.mrf.mxu0
    %v2018 = vadd.f32 0.0, %v2017
    %v2019 = vpop.f32.mrf.mxu0
    %2020 = vmatprep.mubr.bf16.mxu0 %v1316
    %2021 = vmatmul.mubr.bf16.gmra.mxu0 %v904
    %v2022 = vpop.f32.mrf.mxu0
    %v2023 = vadd.f32 0.0, %v2022
    %v2024 = vpop.f32.mrf.mxu0
    %v2025 = vpop.f32.mrf.mxu0
    %v2026 = vadd.f32 0.0, %v2025
    %v2027 = vpop.f32.mrf.mxu0
    %2028 = vmatprep.mubr.bf16.mxu0 %v1319
    %2029 = vmatmul.mubr.bf16.gmra.mxu0 %v906
    %v2030 = vpop.f32.mrf.mxu0
    %v2031 = vadd.f32 0.0, %v2030
    %v2032 = vpop.f32.mrf.mxu0
    %v2033 = vpop.f32.mrf.mxu0
    %v2034 = vadd.f32 0.0, %v2033
    %v2035 = vpop.f32.mrf.mxu0
    %2036 = vmatprep.mubr.bf16.mxu0 %v1322
    %2037 = vmatmul.mubr.bf16.gmra.mxu0 %v908
    %v2038 = vpop.f32.mrf.mxu0
    %v2039 = vadd.f32 0.0, %v2038
    %v2040 = vpop.f32.mrf.mxu0
    %v2041 = vpop.f32.mrf.mxu0
    %v2042 = vadd.f32 0.0, %v2041
    %v2043 = vpop.f32.mrf.mxu0
    %2044 = vmatprep.mubr.bf16.mxu0 %v1325
    %2045 = vmatmul.mubr.bf16.gmra.mxu0 %v910
    %v2046 = vpop.f32.mrf.mxu0
    %v2047 = vadd.f32 0.0, %v2046
    %v2048 = vpop.f32.mrf.mxu0
    %v2049 = vpop.f32.mrf.mxu0
    %v2050 = vadd.f32 0.0, %v2049
    %v2051 = vpop.f32.mrf.mxu0
    %2052 = vmatprep.mubr.bf16.mxu0 %v1328
    %2053 = vmatmul.mubr.bf16.gmra.mxu0 %v912
    %v2054 = vpop.f32.mrf.mxu0
    %v2055 = vadd.f32 0.0, %v2054
    %v2056 = vpop.f32.mrf.mxu0
    %v2057 = vpop.f32.mrf.mxu0
    %v2058 = vadd.f32 0.0, %v2057
    %v2059 = vpop.f32.mrf.mxu0
    %2060 = vmatprep.mubr.bf16.mxu0 %v1331
    %2061 = vmatmul.mubr.bf16.gmra.mxu0 %v914
    %v2062 = vpop.f32.mrf.mxu0
    %v2063 = vadd.f32 0.0, %v2062
    %v2064 = vpop.f32.mrf.mxu0
    %v2065 = vpop.f32.mrf.mxu0
    %v2066 = vadd.f32 0.0, %v2065
    %v2067 = vpop.f32.mrf.mxu0
    %2068 = vmatprep.mubr.bf16.mxu0 %v1334
    %2069 = vmatmul.mubr.bf16.gmra.mxu0 %v916
    %v2070 = vpop.f32.mrf.mxu0
    %v2071 = vadd.f32 0.0, %v2070
    %v2072 = vpop.f32.mrf.mxu0
    %v2073 = vpop.f32.mrf.mxu0
    %v2074 = vpop.f32.mrf.mxu0
    %2075 = vdwg.mxu0
    %v2076 = vmax.f32 %v1375, 0.0
    %v2077 = vmax.f32 %v1378, 0.0
    %v2078 = vmax.f32 %v1383, 0.0
    %v2079 = vmax.f32 %v1386, 0.0
    %v2080 = vmax.f32 %v1391, 0.0
    %v2081 = vmax.f32 %v1394, 0.0
    %v2082 = vmax.f32 %v1399, 0.0
    %v2083 = vmax.f32 %v1402, 0.0
    %v2084 = vmax.f32 %v1407, 0.0
    %v2085 = vmax.f32 %v1410, 0.0
    %v2086 = vmax.f32 %v1415, 0.0
    %v2087 = vmax.f32 %v1418, 0.0
    %v2088 = vmax.f32 %v1423, 0.0
    %v2089 = vmax.f32 %v1426, 0.0
    %v2090 = vmax.f32 %v1431, 0.0
    %v2091 = vmax.f32 %v1434, 0.0
    %v2092 = vmax.f32 %v1439, 0.0
    %v2093 = vmax.f32 %v1442, 0.0
    %v2094 = vmax.f32 %v1447, 0.0
    %v2095 = vmax.f32 %v1450, 0.0
    %v2096 = vmax.f32 %v1455, 0.0
    %v2097 = vmax.f32 %v1458, 0.0
    %v2098 = vmax.f32 %v1463, 0.0
    %v2099 = vmax.f32 %v1466, 0.0
    %v2100 = vmax.f32 %v1471, 0.0
    %v2101 = vmax.f32 %v1474, 0.0
    %v2102 = vmax.f32 %v1479, 0.0
    %v2103 = vmax.f32 %v1482, 0.0
    %v2104 = vmax.f32 %v1487, 0.0
    %v2105 = vmax.f32 %v1490, 0.0
    %v2106 = vmax.f32 %v1495, 0.0
    %v2107 = vmax.f32 %v1498, 0.0
    %v2108 = vmax.f32 %v1503, 0.0
    %v2109 = vmax.f32 %v1506, 0.0
    %v2110 = vmax.f32 %v1511, 0.0
    %v2111 = vmax.f32 %v1514, 0.0
    %v2112 = vmax.f32 %v1519, 0.0
    %v2113 = vmax.f32 %v1522, 0.0
    %v2114 = vmax.f32 %v1527, 0.0
    %v2115 = vmax.f32 %v1530, 0.0
    %v2116 = vmax.f32 %v1535, 0.0
    %v2117 = vmax.f32 %v1538, 0.0
    %v2118 = vmax.f32 %v1543, 0.0
    %v2119 = vmax.f32 %v1546, 0.0
    %v2120 = vmax.f32 %v1551, 0.0
    %v2121 = vmax.f32 %v1554, 0.0
    %v2122 = vmax.f32 %v1559, 0.0
    %v2123 = vmax.f32 %v1562, 0.0
    %v2124 = vmax.f32 %v1567, 0.0
    %v2125 = vmax.f32 %v1570, 0.0
    %v2126 = vmax.f32 %v1575, 0.0
    %v2127 = vmax.f32 %v1578, 0.0
    %v2128 = vmax.f32 %v1583, 0.0
    %v2129 = vmax.f32 %v1586, 0.0
    %v2130 = vmax.f32 %v1591, 0.0
    %v2131 = vmax.f32 %v1594, 0.0
    %v2132 = vmax.f32 %v1599, 0.0
    %v2133 = vmax.f32 %v1602, 0.0
    %v2134 = vmax.f32 %v1607, 0.0
    %v2135 = vmax.f32 %v1610, 0.0
    %v2136 = vmax.f32 %v1615, 0.0
    %v2137 = vmax.f32 %v1618, 0.0
    %v2138 = vmax.f32 %v1623, 0.0
    %v2139 = vmax.f32 %v1626, 0.0
    %v2140 = vmax.f32 %v1631, 0.0
    %v2141 = vmax.f32 %v1634, 0.0
    %v2142 = vmax.f32 %v1639, 0.0
    %v2143 = vmax.f32 %v1642, 0.0
    %v2144 = vmax.f32 %v1647, 0.0
    %v2145 = vmax.f32 %v1650, 0.0
    %v2146 = vmax.f32 %v1655, 0.0
    %v2147 = vmax.f32 %v1658, 0.0
    %v2148 = vmax.f32 %v1663, 0.0
    %v2149 = vmax.f32 %v1666, 0.0
    %v2150 = vmax.f32 %v1671, 0.0
    %v2151 = vmax.f32 %v1674, 0.0
    %v2152 = vmax.f32 %v1679, 0.0
    %v2153 = vmax.f32 %v1682, 0.0
    %v2154 = vmax.f32 %v1687, 0.0
    %v2155 = vmax.f32 %v1690, 0.0
    %v2156 = vmax.f32 %v1695, 0.0
    %v2157 = vmax.f32 %v1698, 0.0
    %v2158 = vmax.f32 %v1703, 0.0
    %v2159 = vmax.f32 %v1706, 0.0
    %v2160 = vmax.f32 %v1711, 0.0
    %v2161 = vmax.f32 %v1714, 0.0
    %v2162 = vmax.f32 %v1719, 0.0
    %v2163 = vmax.f32 %v1722, 0.0
    %v2164 = vmax.f32 %v1727, 0.0
    %v2165 = vmax.f32 %v1730, 0.0
    %v2166 = vmax.f32 %v1735, 0.0
    %v2167 = vmax.f32 %v1738, 0.0
    %v2168 = vmax.f32 %v1743, 0.0
    %v2169 = vmax.f32 %v1746, 0.0
    %v2170 = vmax.f32 %v1751, 0.0
    %v2171 = vmax.f32 %v1754, 0.0
    %v2172 = vmax.f32 %v1759, 0.0
    %v2173 = vmax.f32 %v1762, 0.0
    %v2174 = vmax.f32 %v1767, 0.0
    %v2175 = vmax.f32 %v1770, 0.0
    %v2176 = vmax.f32 %v1775, 0.0
    %v2177 = vmax.f32 %v1778, 0.0
    %v2178 = vmax.f32 %v1783, 0.0
    %v2179 = vmax.f32 %v1786, 0.0
    %v2180 = vmax.f32 %v1791, 0.0
    %v2181 = vmax.f32 %v1794, 0.0
    %v2182 = vmax.f32 %v1799, 0.0
    %v2183 = vmax.f32 %v1802, 0.0
    %v2184 = vmax.f32 %v1807, 0.0
    %v2185 = vmax.f32 %v1810, 0.0
    %v2186 = vmax.f32 %v1815, 0.0
    %v2187 = vmax.f32 %v1818, 0.0
    %v2188 = vmax.f32 %v1823, 0.0
    %v2189 = vmax.f32 %v1826, 0.0
    %v2190 = vmax.f32 %v1831, 0.0
    %v2191 = vmax.f32 %v1834, 0.0
    %v2192 = vmax.f32 %v1839, 0.0
    %v2193 = vmax.f32 %v1842, 0.0
    %v2194 = vmax.f32 %v1847, 0.0
    %v2195 = vmax.f32 %v1850, 0.0
    %v2196 = vmax.f32 %v1855, 0.0
    %v2197 = vmax.f32 %v1858, 0.0
    %v2198 = vmax.f32 %v1863, 0.0
    %v2199 = vmax.f32 %v1866, 0.0
    %v2200 = vmax.f32 %v1871, 0.0
    %v2201 = vmax.f32 %v1874, 0.0
    %v2202 = vmax.f32 %v1879, 0.0
    %v2203 = vmax.f32 %v1882, 0.0
    %v2204 = vmax.f32 %v1887, 0.0
    %v2205 = vmax.f32 %v1890, 0.0
    %v2206 = vmax.f32 %v1895, 0.0
    %v2207 = vmax.f32 %v1898, 0.0
    %v2208 = vmax.f32 %v1903, 0.0
    %v2209 = vmax.f32 %v1906, 0.0
    %v2210 = vmax.f32 %v1911, 0.0
    %v2211 = vmax.f32 %v1914, 0.0
    %v2212 = vmax.f32 %v1919, 0.0
    %v2213 = vmax.f32 %v1922, 0.0
    %v2214 = vmax.f32 %v1927, 0.0
    %v2215 = vmax.f32 %v1930, 0.0
    %v2216 = vmax.f32 %v1935, 0.0
    %v2217 = vmax.f32 %v1938, 0.0
    %v2218 = vmax.f32 %v1943, 0.0
    %v2219 = vmax.f32 %v1946, 0.0
    %v2220 = vmax.f32 %v1951, 0.0
    %v2221 = vmax.f32 %v1954, 0.0
    %v2222 = vmax.f32 %v1959, 0.0
    %v2223 = vmax.f32 %v1962, 0.0
    %v2224 = vmax.f32 %v1967, 0.0
    %v2225 = vmax.f32 %v1970, 0.0
    %v2226 = vmax.f32 %v1975, 0.0
    %v2227 = vmax.f32 %v1978, 0.0
    %v2228 = vmax.f32 %v1983, 0.0
    %v2229 = vmax.f32 %v1986, 0.0
    %v2230 = vmax.f32 %v1991, 0.0
    %v2231 = vmax.f32 %v1994, 0.0
    %v2232 = vmax.f32 %v1999, 0.0
    %v2233 = vmax.f32 %v2002, 0.0
    %v2234 = vmax.f32 %v2007, 0.0
    %v2235 = vmax.f32 %v2010, 0.0
    %v2236 = vmax.f32 %v2015, 0.0
    %v2237 = vmax.f32 %v2018, 0.0
    %v2238 = vmax.f32 %v2023, 0.0
    %v2239 = vmax.f32 %v2026, 0.0
    %v2240 = vmax.f32 %v2031, 0.0
    %v2241 = vmax.f32 %v2034, 0.0
    %v2242 = vmax.f32 %v2039, 0.0
    %v2243 = vmax.f32 %v2042, 0.0
    %v2244 = vmax.f32 %v2047, 0.0
    %v2245 = vmax.f32 %v2050, 0.0
    %v2246 = vmax.f32 %v2055, 0.0
    %v2247 = vmax.f32 %v2058, 0.0
    %v2248 = vmax.f32 %v2063, 0.0
    %v2249 = vmax.f32 %v2066, 0.0
    %v2250 = vmax.f32 %v2071, 0.0
    %v2251 = vmax.f32 %v2076, %v2101
    %v2252 = vmax.f32 %v2077, %v2102
    %v2253 = vmax.f32 %v2078, %v2103
    %v2254 = vmax.f32 %v2079, %v2104
    %v2255 = vmax.f32 %v2080, %v2105
    %v2256 = vmax.f32 %v2081, %v2106
    %v2257 = vmax.f32 %v2082, %v2107
    %v2258 = vmax.f32 %v2083, %v2108
    %v2259 = vmax.f32 %v2084, %v2109
    %v2260 = vmax.f32 %v2085, %v2110
    %v2261 = vmax.f32 %v2086, %v2111
    %v2262 = vmax.f32 %v2087, %v2112
    %v2263 = vmax.f32 %v2088, %v2113
    %v2264 = vmax.f32 %v2089, %v2114
    %v2265 = vmax.f32 %v2090, %v2115
    %v2266 = vmax.f32 %v2091, %v2116
    %v2267 = vmax.f32 %v2092, %v2117
    %v2268 = vmax.f32 %v2093, %v2118
    %v2269 = vmax.f32 %v2094, %v2119
    %v2270 = vmax.f32 %v2095, %v2120
    %v2271 = vmax.f32 %v2096, %v2121
    %v2272 = vmax.f32 %v2097, %v2122
    %v2273 = vmax.f32 %v2098, %v2123
    %v2274 = vmax.f32 %v2099, %v2124
    %v2275 = vmax.f32 %v2100, %v2125
    %v2276 = vmax.f32 %v2251, %v2126
    %v2277 = vmax.f32 %v2252, %v2127
    %v2278 = vmax.f32 %v2253, %v2128
    %v2279 = vmax.f32 %v2254, %v2129
    %v2280 = vmax.f32 %v2255, %v2130
    %v2281 = vmax.f32 %v2256, %v2131
    %v2282 = vmax.f32 %v2257, %v2132
    %v2283 = vmax.f32 %v2258, %v2133
    %v2284 = vmax.f32 %v2259, %v2134
    %v2285 = vmax.f32 %v2260, %v2135
    %v2286 = vmax.f32 %v2261, %v2136
    %v2287 = vmax.f32 %v2262, %v2137
    %v2288 = vmax.f32 %v2263, %v2138
    %v2289 = vmax.f32 %v2264, %v2139
    %v2290 = vmax.f32 %v2265, %v2140
    %v2291 = vmax.f32 %v2266, %v2141
    %v2292 = vmax.f32 %v2267, %v2142
    %v2293 = vmax.f32 %v2268, %v2143
    %v2294 = vmax.f32 %v2269, %v2144
    %v2295 = vmax.f32 %v2270, %v2145
    %v2296 = vmax.f32 %v2271, %v2146
    %v2297 = vmax.f32 %v2272, %v2147
    %v2298 = vmax.f32 %v2273, %v2148
    %v2299 = vmax.f32 %v2274, %v2149
    %v2300 = vmax.f32 %v2275, %v2150
    %v2301 = vmax.f32 %v2276, %v2151
    %v2302 = vmax.f32 %v2277, %v2152
    %v2303 = vmax.f32 %v2278, %v2153
    %v2304 = vmax.f32 %v2279, %v2154
    %v2305 = vmax.f32 %v2280, %v2155
    %v2306 = vmax.f32 %v2281, %v2156
    %v2307 = vmax.f32 %v2282, %v2157
    %v2308 = vmax.f32 %v2283, %v2158
    %v2309 = vmax.f32 %v2284, %v2159
    %v2310 = vmax.f32 %v2285, %v2160
    %v2311 = vmax.f32 %v2286, %v2161
    %v2312 = vmax.f32 %v2287, %v2162
    %v2313 = vmax.f32 %v2288, %v2163
    %v2314 = vmax.f32 %v2289, %v2164
    %v2315 = vmax.f32 %v2290, %v2165
    %v2316 = vmax.f32 %v2291, %v2166
    %v2317 = vmax.f32 %v2292, %v2167
    %v2318 = vmax.f32 %v2293, %v2168
    %v2319 = vmax.f32 %v2294, %v2169
    %v2320 = vmax.f32 %v2295, %v2170
    %v2321 = vmax.f32 %v2296, %v2171
    %v2322 = vmax.f32 %v2297, %v2172
    %v2323 = vmax.f32 %v2298, %v2173
    %v2324 = vmax.f32 %v2299, %v2174
    %v2325 = vmax.f32 %v2300, %v2175
    %v2326 = vmax.f32 %v2301, %v2176
    %v2327 = vmax.f32 %v2302, %v2177
    %v2328 = vmax.f32 %v2303, %v2178
    %v2329 = vmax.f32 %v2304, %v2179
    %v2330 = vmax.f32 %v2305, %v2180
    %v2331 = vmax.f32 %v2306, %v2181
    %v2332 = vmax.f32 %v2307, %v2182
    %v2333 = vmax.f32 %v2308, %v2183
    %v2334 = vmax.f32 %v2309, %v2184
    %v2335 = vmax.f32 %v2310, %v2185
    %v2336 = vmax.f32 %v2311, %v2186
    %v2337 = vmax.f32 %v2312, %v2187
    %v2338 = vmax.f32 %v2313, %v2188
    %v2339 = vmax.f32 %v2314, %v2189
    %v2340 = vmax.f32 %v2315, %v2190
    %v2341 = vmax.f32 %v2316, %v2191
    %v2342 = vmax.f32 %v2317, %v2192
    %v2343 = vmax.f32 %v2318, %v2193
    %v2344 = vmax.f32 %v2319, %v2194
    %v2345 = vmax.f32 %v2320, %v2195
    %v2346 = vmax.f32 %v2321, %v2196
    %v2347 = vmax.f32 %v2322, %v2197
    %v2348 = vmax.f32 %v2323, %v2198
    %v2349 = vmax.f32 %v2324, %v2199
    %v2350 = vmax.f32 %v2325, %v2200
    %v2351 = vmax.f32 %v2326, %v2201
    %v2352 = vmax.f32 %v2327, %v2202
    %v2353 = vmax.f32 %v2328, %v2203
    %v2354 = vmax.f32 %v2329, %v2204
    %v2355 = vmax.f32 %v2330, %v2205
    %v2356 = vmax.f32 %v2331, %v2206
    %v2357 = vmax.f32 %v2332, %v2207
    %v2358 = vmax.f32 %v2333, %v2208
    %v2359 = vmax.f32 %v2334, %v2209
    %v2360 = vmax.f32 %v2335, %v2210
    %v2361 = vmax.f32 %v2336, %v2211
    %v2362 = vmax.f32 %v2337, %v2212
    %v2363 = vmax.f32 %v2338, %v2213
    %v2364 = vmax.f32 %v2339, %v2214
    %v2365 = vmax.f32 %v2340, %v2215
    %v2366 = vmax.f32 %v2341, %v2216
    %v2367 = vmax.f32 %v2342, %v2217
    %v2368 = vmax.f32 %v2343, %v2218
    %v2369 = vmax.f32 %v2344, %v2219
    %v2370 = vmax.f32 %v2345, %v2220
    %v2371 = vmax.f32 %v2346, %v2221
    %v2372 = vmax.f32 %v2347, %v2222
    %v2373 = vmax.f32 %v2348, %v2223
    %v2374 = vmax.f32 %v2349, %v2224
    %v2375 = vmax.f32 %v2350, %v2225
    %v2376 = vmax.f32 %v2351, %v2226
    %v2377 = vmax.f32 %v2352, %v2227
    %v2378 = vmax.f32 %v2353, %v2228
    %v2379 = vmax.f32 %v2354, %v2229
    %v2380 = vmax.f32 %v2355, %v2230
    %v2381 = vmax.f32 %v2356, %v2231
    %v2382 = vmax.f32 %v2357, %v2232
    %v2383 = vmax.f32 %v2358, %v2233
    %v2384 = vmax.f32 %v2359, %v2234
    %v2385 = vmax.f32 %v2360, %v2235
    %v2386 = vmax.f32 %v2361, %v2236
    %v2387 = vmax.f32 %v2362, %v2237
    %v2388 = vmax.f32 %v2363, %v2238
    %v2389 = vmax.f32 %v2364, %v2239
    %v2390 = vmax.f32 %v2365, %v2240
    %v2391 = vmax.f32 %v2366, %v2241
    %v2392 = vmax.f32 %v2367, %v2242
    %v2393 = vmax.f32 %v2368, %v2243
    %v2394 = vmax.f32 %v2369, %v2244
    %v2395 = vmax.f32 %v2370, %v2245
    %v2396 = vmax.f32 %v2371, %v2246
    %v2397 = vmax.f32 %v2372, %v2247
    %v2398 = vmax.f32 %v2373, %v2248
    %v2399 = vmax.f32 %v2374, %v2249
    %v2400 = vmax.f32 %v2375, %v2250
    %v2401 = vld [vmem:[%s2] sm:$0xff]
    %v2402 = vld [vmem:[%s2 + $0x8] sm:$0xff]
    %v2403 = vld [vmem:[%s2 + $0x10] sm:$0xff]
    %v2404 = vld [vmem:[%s2 + $0x18] sm:$0xff]
    %v2405 = vld [vmem:[%s2 + $0x20] sm:$0xff]
    %v2406 = vld [vmem:[%s2 + $0x28] sm:$0xff]
    %v2407 = vld [vmem:[%s2 + $0x30] sm:$0xff]
    %v2408 = vld [vmem:[%s2 + $0x38] sm:$0xff]
    %v2409 = vld [vmem:[%s2 + $0x40] sm:$0xff]
    %v2410 = vld [vmem:[%s2 + $0x48] sm:$0xff]
    %v2411 = vld [vmem:[%s2 + $0x50] sm:$0xff]
    %v2412 = vld [vmem:[%s2 + $0x58] sm:$0xff]
    %v2413 = vld [vmem:[%s2 + $0x60] sm:$0xff]
    %v2414 = vld [vmem:[%s2 + $0x68] sm:$0xff]
    %v2415 = vld [vmem:[%s2 + $0x70] sm:$0xff]
    %v2416 = vld [vmem:[%s2 + $0x78] sm:$0xff]
    %v2417 = vld [vmem:[%s2 + $0x80] sm:$0xff]
    %v2418 = vld [vmem:[%s2 + $0x88] sm:$0xff]
    %v2419 = vld [vmem:[%s2 + $0x90] sm:$0xff]
    %v2420 = vld [vmem:[%s2 + $0x98] sm:$0xff]
    %v2421 = vld [vmem:[%s2 + $0xa0] sm:$0xff]
    %v2422 = vld [vmem:[%s2 + $0xa8] sm:$0xff]
    %v2423 = vld [vmem:[%s2 + $0xb0] sm:$0xff]
    %v2424 = vld [vmem:[%s2 + $0xb8] sm:$0xff]
    %v2425 = vld [vmem:[%s2 + $0xc0] sm:$0xff]
    %2427 = vset.pattern.permute.xlu0 0
    %2428 = vperm.xlu0 %2427, %v2401
    %v2429 = vpop.permute.xlu0 %2428
    %2432 = vset.pattern.permute.xlu0 0
    %2433 = vperm.xlu0 %2432, %v2402
    %v2434 = vpop.permute.xlu0 %2433
    %2437 = vset.pattern.permute.xlu0 0
    %2438 = vperm.xlu0 %2437, %v2403
    %v2439 = vpop.permute.xlu0 %2438
    %2442 = vset.pattern.permute.xlu0 0
    %2443 = vperm.xlu0 %2442, %v2404
    %v2444 = vpop.permute.xlu0 %2443
    %2447 = vset.pattern.permute.xlu0 0
    %2448 = vperm.xlu0 %2447, %v2405
    %v2449 = vpop.permute.xlu0 %2448
    %2452 = vset.pattern.permute.xlu0 0
    %2453 = vperm.xlu0 %2452, %v2406
    %v2454 = vpop.permute.xlu0 %2453
    %2457 = vset.pattern.permute.xlu0 0
    %2458 = vperm.xlu0 %2457, %v2407
    %v2459 = vpop.permute.xlu0 %2458
    %2462 = vset.pattern.permute.xlu0 0
    %2463 = vperm.xlu0 %2462, %v2408
    %v2464 = vpop.permute.xlu0 %2463
    %2467 = vset.pattern.permute.xlu0 0
    %2468 = vperm.xlu0 %2467, %v2409
    %v2469 = vpop.permute.xlu0 %2468
    %2472 = vset.pattern.permute.xlu0 0
    %2473 = vperm.xlu0 %2472, %v2410
    %v2474 = vpop.permute.xlu0 %2473
    %2477 = vset.pattern.permute.xlu0 0
    %2478 = vperm.xlu0 %2477, %v2411
    %v2479 = vpop.permute.xlu0 %2478
    %2482 = vset.pattern.permute.xlu0 0
    %2483 = vperm.xlu0 %2482, %v2412
    %v2484 = vpop.permute.xlu0 %2483
    %2487 = vset.pattern.permute.xlu0 0
    %2488 = vperm.xlu0 %2487, %v2413
    %v2489 = vpop.permute.xlu0 %2488
    %2492 = vset.pattern.permute.xlu0 0
    %2493 = vperm.xlu0 %2492, %v2414
    %v2494 = vpop.permute.xlu0 %2493
    %2497 = vset.pattern.permute.xlu0 0
    %2498 = vperm.xlu0 %2497, %v2415
    %v2499 = vpop.permute.xlu0 %2498
    %2502 = vset.pattern.permute.xlu0 0
    %2503 = vperm.xlu0 %2502, %v2416
    %v2504 = vpop.permute.xlu0 %2503
    %2507 = vset.pattern.permute.xlu0 0
    %2508 = vperm.xlu0 %2507, %v2417
    %v2509 = vpop.permute.xlu0 %2508
    %2512 = vset.pattern.permute.xlu0 0
    %2513 = vperm.xlu0 %2512, %v2418
    %v2514 = vpop.permute.xlu0 %2513
    %2517 = vset.pattern.permute.xlu0 0
    %2518 = vperm.xlu0 %2517, %v2419
    %v2519 = vpop.permute.xlu0 %2518
    %2522 = vset.pattern.permute.xlu0 0
    %2523 = vperm.xlu0 %2522, %v2420
    %v2524 = vpop.permute.xlu0 %2523
    %2527 = vset.pattern.permute.xlu0 0
    %2528 = vperm.xlu0 %2527, %v2421
    %v2529 = vpop.permute.xlu0 %2528
    %2532 = vset.pattern.permute.xlu0 0
    %2533 = vperm.xlu0 %2532, %v2422
    %v2534 = vpop.permute.xlu0 %2533
    %2537 = vset.pattern.permute.xlu0 0
    %2538 = vperm.xlu0 %2537, %v2423
    %v2539 = vpop.permute.xlu0 %2538
    %2542 = vset.pattern.permute.xlu0 0
    %2543 = vperm.xlu0 %2542, %v2424
    %v2544 = vpop.permute.xlu0 %2543
    %2547 = vset.pattern.permute.xlu0 0
    %2548 = vperm.xlu0 %2547, %v2425
    %v2549 = vpop.permute.xlu0 %2548
    %v2551 = vmul.f32 %v2376, %v2429
    %v2552 = vmul.f32 %v2377, %v2434
    %v2553 = vmul.f32 %v2378, %v2439
    %v2554 = vmul.f32 %v2379, %v2444
    %v2555 = vmul.f32 %v2380, %v2449
    %v2556 = vmul.f32 %v2381, %v2454
    %v2557 = vmul.f32 %v2382, %v2459
    %v2558 = vmul.f32 %v2383, %v2464
    %v2559 = vmul.f32 %v2384, %v2469
    %v2560 = vmul.f32 %v2385, %v2474
    %v2561 = vmul.f32 %v2386, %v2479
    %v2562 = vmul.f32 %v2387, %v2484
    %v2563 = vmul.f32 %v2388, %v2489
    %v2564 = vmul.f32 %v2389, %v2494
    %v2565 = vmul.f32 %v2390, %v2499
    %v2566 = vmul.f32 %v2391, %v2504
    %v2567 = vmul.f32 %v2392, %v2509
    %v2568 = vmul.f32 %v2393, %v2514
    %v2569 = vmul.f32 %v2394, %v2519
    %v2570 = vmul.f32 %v2395, %v2524
    %v2571 = vmul.f32 %v2396, %v2529
    %v2572 = vmul.f32 %v2397, %v2534
    %v2573 = vmul.f32 %v2398, %v2539
    %v2574 = vmul.f32 %v2399, %v2544
    %v2575 = vmul.f32 %v2400, %v2549
    %v2576 = vadd.f32 %v2551, %v2552
    %v2577 = vadd.f32 %v2576, %v2553
    %v2578 = vadd.f32 %v2577, %v2554
    %v2579 = vadd.f32 %v2578, %v2555
    %v2580 = vadd.f32 %v2579, %v2556
    %v2581 = vadd.f32 %v2580, %v2557
    %v2582 = vadd.f32 %v2581, %v2558
    %v2583 = vadd.f32 %v2582, %v2559
    %v2584 = vadd.f32 %v2583, %v2560
    %v2585 = vadd.f32 %v2584, %v2561
    %v2586 = vadd.f32 %v2585, %v2562
    %v2587 = vadd.f32 %v2586, %v2563
    %v2588 = vadd.f32 %v2587, %v2564
    %v2589 = vadd.f32 %v2588, %v2565
    %v2590 = vadd.f32 %v2589, %v2566
    %v2591 = vadd.f32 %v2590, %v2567
    %v2592 = vadd.f32 %v2591, %v2568
    %v2593 = vadd.f32 %v2592, %v2569
    %v2594 = vadd.f32 %v2593, %v2570
    %v2595 = vadd.f32 %v2594, %v2571
    %v2596 = vadd.f32 %v2595, %v2572
    %v2597 = vadd.f32 %v2596, %v2573
    %v2598 = vadd.f32 %v2597, %v2574
    %v2599 = vadd.f32 %v2598, %v2575
    %v2600 = vrot.slane %v2599, 4
    %v2601 = vadd.f32 %v2599, %v2600
    %v2602 = vrot.slane %v2601, 2
    %v2603 = vadd.f32 %v2601, %v2602
    %v2604 = vrot.slane %v2603, 1
    %v2605 = vadd.f32 %v2603, %v2604
    %s2606 = sld [smem:[#allocation2]]
    %v2607 = vstv %s2606
    %v2608 = vadd.f32 %v2605, %v2607
    %2609 = vst [vmem:[#allocation3] sm:$0x1] %v2608
    // Predicated region
    $region18: #{tpu_custom_call.1} parent=1 // pred_check
      _
    $region19: #{tpu_custom_call.1} parent=1 // pred_check_branch
      %2611 = sbr.rel (0) target = $region21
    $region20: #{tpu_custom_call.1} parent=1 // pred_region
      %s2613 = ssub.s32 16, 16
      %2614 = vsyncadd [#allocation4], %s2613
      %s2616 = sshll.u32 [#allocation3], 4
      %s2617 = int_to_ptr.vmem [resolvable:$true] %s2616
      %2619 = dma.vmem_to_hbm [thread:$0]  %s2617, 16, %s4, [#allocation4]
    $region21: #{tpu_custom_call.1} parent=1 // pred_fallthru
      _
    // Predicated region
    $region22: #{tpu_custom_call.1} parent=1 // pred_check
      _
    $region23: #{tpu_custom_call.1} parent=1 // pred_check_branch
      %2621 = sbr.rel (0) target = $region25
    $region24: #{tpu_custom_call.1} parent=1 // pred_region
      %2622 = dma.done [#allocation4], 16
    $region25: #{tpu_custom_call.1} parent=1 // pred_fallthru
      _
    %2623 = vsyncpa [#allocation4], 1

</llo_original>
